<compile_context>
chip_gen: v7x
topology: tpu7x:2x2x1
jax: 0.10.0
libtpu: 0.0.40
codegen_flags: <defaults>
</compile_context>

<pallas_src>
import functools
import math

import jax
import jax.numpy as jnp
from jax.experimental import pallas as pl
from jax.experimental.pallas import tpu as pltpu

GEOM_PAD = 8  # pad the 3-D coordinates to 8 lanes for a friendlier tiny matmul


def _round_up(x, m):
    return (x + m - 1) // m * m


def _knn_indices(coords, k):
    """Indices of the k nearest neighbours (self-loop included) per node.

    Uses the |a|^2 + |b|^2 - 2ab identity instead of an [N, N, 3] broadcast.
    # TODO(synk): dgl.knn_graph tie-breaking may differ; lax.top_k keeps the
    # lowest column index among exactly-equal distances.
    # TODO(synk): this is still an O(N^2) XLA op outside the Pallas kernel; a
    # blocked/tiled kNN would be needed for very large graphs.
    """
    gn = jnp.sum(coords * coords, axis=-1)
    pd2 = gn[:, None] + gn[None, :] - 2.0 * (coords @ coords.T)
    _, nbr_idx = jax.lax.top_k(-pd2, k)
    return nbr_idx.astype(jnp.int32)


def _mha_kernel(occ_ref, kblk_ref, nbr_ref, q_ref, kv_ref, gq_ref, gkt_ref,
                qn_ref, kn_ref, out_ref, acc_scr, z_scr,
                *, out_dim, d_pad, n_neigh, tile_k, mxu_dtype):
    """One (query-tile, key-tile) grid step of kNN-masked graph attention.

    occ_ref/kblk_ref : SMEM [grid_q, grid_k] int32  (scalar prefetch)
    nbr_ref : [tq, n_neigh] int32   kNN neighbour ids of the query rows
    q_ref   : [tq, d_pad]   mxu_dtype  pre-projected Q (lane-dense)
    kv_ref  : [tk, 2*d_pad] mxu_dtype  pre-projected K|V (lane-dense)
    gq_ref  : [tq, GEOM_PAD] / gkt_ref : [GEOM_PAD, tk]   G_h coords (padded)
    qn_ref  : [tq, 1] / kn_ref : [1, tk]   precomputed |G_h|^2
    out_ref : [tq, d_pad]           head_out (lane-dense; sliced in wrapper)
    acc_scr : [tq, d_pad] f32;  z_scr : [tq, 1] f32
    """
    del kblk_ref  # only used by the index_maps
    qi = pl.program_id(0)
    kj = pl.program_id(1)
    inv_sqrt_d = 1.0 / math.sqrt(out_dim)

    # ---- once per query tile: zero the accumulators --------------------------
    @pl.when(kj == 0)
    def _():
        acc_scr[...] = jnp.zeros_like(acc_scr)
        z_scr[...] = jnp.zeros_like(z_scr)

    # ---- heavy body only on occupied (query-tile, key-tile) pairs ------------
    @pl.when(occ_ref[qi, kj] != 0)
    def _():
        kv = kv_ref[...]                         # [tk, 2*d_pad], already mxu_dtype
        k = kv[:, :d_pad]                        # lane-aligned
        v = kv[:, d_pad:]                        # lane-aligned

        # score[i, j] = K_h[src=j] . Q_h[dst=i]  (padded lanes are exactly 0)
        score = jax.lax.dot_general(
            q_ref[...], k, dimension_numbers=(((1,), (1,)), ((), ())),
            preferred_element_type=jnp.float32)                  # [tq, tk]
        score_e = jnp.exp(jnp.clip(score * inv_sqrt_d, -5.0, 5.0))

        # kNN mask tile rebuilt from the [tq, n_neigh] neighbour table
        col_ids = tile_k * kj + jax.lax.broadcasted_iota(
            jnp.int32, score.shape, 1)
        nbr = nbr_ref[...]
        mask = col_ids == nbr[:, 0:1]
        for t in range(1, n_neigh):                              # static unroll
            mask = jnp.logical_or(mask, col_ids == nbr[:, t:t + 1])

        # masked score, reused for both wV and z (copy_e('score') -> sum -> 'z')
        sm = jnp.where(mask, score_e, 0.0)

        # RelativePositionMessage distance via the MXU identity; norms are
        # precomputed in the wrapper (no per-step cross-lane reductions).
        cross = jnp.dot(gq_ref[...], gkt_ref[...],
                        preferred_element_type=jnp.float32)      # [tq, tk]
        d2 = jnp.maximum(qn_ref[...] + kn_ref[...] - 2.0 * cross, 0.0)
        dist = -jnp.sqrt(d2 + 1e-6)
        # dist <= 0 always, so the +5 side of the clamp is dead -> maximum only
        distance = jnp.exp(jnp.maximum(dist * inv_sqrt_d, -5.0))

        w = sm * distance
        acc_scr[...] += jnp.dot(w.astype(mxu_dtype), v,
                                preferred_element_type=jnp.float32)
        z_scr[...] += jnp.sum(sm, axis=-1, keepdims=True)

    # ---- finalize: head_out = wV / z where z > 0 ------------------------------
    @pl.when(kj == pl.num_programs(1) - 1)
    def _():
        z = z_scr[...]
        # guarded reciprocal: no inf/NaN even if a row has no neighbours
        inv = pl.reciprocal(jnp.maximum(z, 1e-30))
        out_ref[...] = jnp.where(z > 0.0, acc_scr[...] * inv, acc_scr[...])


def multi_head_attention(h, wq, wk, wv, wg, *, n_neigh, out_dim, num_heads=1,
                         tile_q=512, tile_k=512, mxu_dtype=jnp.float32):
    # TODO(synk): the original module's .view(-1, 1, 1) edge-weight broadcast
    # is only consistent for num_heads == 1; multi-head is not implemented.
    assert num_heads == 1
    n, in_dim = h.shape
    d_pad = _round_up(max(out_dim, 128), 128)     # lane-dense output width

    # --- wrapper glue: tiny G projection + kNN neighbour table ----------------
    g_h = (h @ wg).reshape(n, 3)                  # s_l.view(-1, 3)
    nbr_idx = _knn_indices(g_h, n_neigh)          # [N, k] int32

    # --- pad N so the (tq, tk) grid divides it.  Padded key columns can never
    #     match nbr_idx (< n); padded query rows get index -1 (match nothing).
    tq, tk = tile_q, tile_k
    n_pad = _round_up(n, math.lcm(tq, tk))
    pad = n_pad - n

    # --- projections hoisted out of the kernel (one-shot XLA matmuls) ---------
    wq_pad = jnp.zeros((in_dim, d_pad), jnp.float32).at[:, :out_dim].set(wq)
    wkv_pad = (jnp.zeros((in_dim, 2 * d_pad), jnp.float32)
               .at[:, :out_dim].set(wk)
               .at[:, d_pad:d_pad + out_dim].set(wv))
    q = jnp.pad(h @ wq_pad, ((0, pad), (0, 0))).astype(mxu_dtype)
    kv = jnp.pad(h @ wkv_pad, ((0, pad), (0, 0))).astype(mxu_dtype)

    # --- geometry (coords padded to GEOM_PAD lanes; norms precomputed) --------
    g_p = jnp.zeros((n_pad, GEOM_PAD), jnp.float32).at[:n, :3].set(g_h)
    gt_p = g_p.T                                  # [GEOM_PAD, n_pad]
    gn = jnp.sum(g_p * g_p, axis=-1)
    qn = gn.reshape(n_pad, 1)
    kn = gn.reshape(1, n_pad)
    nbr_p = jnp.pad(nbr_idx, ((0, pad), (0, 0)), constant_values=-1)

    # --- tile occupancy + key-block schedule (scalar prefetch, SMEM) ----------
    grid_q, grid_k = n_pad // tq, n_pad // tk
    rows = jnp.repeat(jnp.arange(n, dtype=jnp.int32) // tq, n_neigh)
    cols = (nbr_idx // tk).reshape(-1).astype(jnp.int32)
    occ = jnp.zeros((grid_q, grid_k), jnp.int32).at[rows, cols].max(1)
    # skipped tiles point at the most recent occupied key block (or 0) so runs
    # of skipped steps keep the same block index -> the pipeline skips the DMA.
    blk = jnp.where(occ > 0, jnp.arange(grid_k, dtype=jnp.int32)[None, :], -1)
    kblk = jnp.maximum(jax.lax.cummax(blk, axis=1), 0).astype(jnp.int32)

    grid = (grid_q, grid_k)

    # advisory cost estimate (dense upper bound) for XLA's scheduler
    itemsize = jnp.dtype(mxu_dtype).itemsize
    cost = pl.CostEstimate(
        flops=int(n_pad * n_pad * (4 * d_pad + 2 * GEOM_PAD)),
        transcendentals=int(3 * n_pad * n_pad),
        bytes_accessed=int(grid_q * n_pad * 2 * d_pad * itemsize
                           + n_pad * d_pad * (itemsize + 4)
                           + n_pad * 4 * (n_neigh + 2 * GEOM_PAD + 2)))

    out = pl.pallas_call(
        functools.partial(_mha_kernel, out_dim=out_dim, d_pad=d_pad,
                          n_neigh=n_neigh, tile_k=tk, mxu_dtype=mxu_dtype),
        out_shape=jax.ShapeDtypeStruct((n_pad, d_pad), jnp.float32),
        grid_spec=pltpu.PrefetchScalarGridSpec(
            num_scalar_prefetch=2,                # occ, kblk -> SMEM
            grid=grid,
            in_specs=[
                pl.BlockSpec((tq, n_neigh),
                             lambda i, j, occ, kblk: (i, 0)),          # nbr ids
                pl.BlockSpec((tq, d_pad),
                             lambda i, j, occ, kblk: (i, 0)),          # Q (dst)
                pl.BlockSpec((tk, 2 * d_pad),
                             lambda i, j, occ, kblk: (kblk[i, j], 0)), # K|V (src)
                pl.BlockSpec((tq, GEOM_PAD),
                             lambda i, j, occ, kblk: (i, 0)),          # G (dst)
                pl.BlockSpec((GEOM_PAD, tk),
                             lambda i, j, occ, kblk: (0, kblk[i, j])), # G^T (src)
                pl.BlockSpec((tq, 1),
                             lambda i, j, occ, kblk: (i, 0)),          # |G|^2 dst
                pl.BlockSpec((1, tk),
                             lambda i, j, occ, kblk: (0, kblk[i, j])), # |G|^2 src
            ],
            out_specs=pl.BlockSpec((tq, d_pad),
                                   lambda i, j, occ, kblk: (i, 0)),
            scratch_shapes=[
                pltpu.VMEM((tq, d_pad), jnp.float32),   # wV accumulator
                pltpu.VMEM((tq, 1), jnp.float32),       # z accumulator
            ]),
        compiler_params=pltpu.CompilerParams(
            dimension_semantics=("parallel", "arbitrary"),
            vmem_limit_bytes=32 * 1024 * 1024),
        cost_estimate=cost,
    )(occ, kblk, nbr_p, q, kv, g_p, gt_p, qn, kn)

    return out[:n, :out_dim].reshape(n, num_heads, out_dim)


def _reference(h, wq, wk, wv, g_h, mask, out_dim):
    """Pure-JAX reference replicating the PyTorch/DGL semantics."""
    q, k, v = h @ wq, h @ wk, h @ wv
    inv = 1.0 / math.sqrt(out_dim)
    score_e = jnp.exp(jnp.clip((q @ k.T) * inv, -5.0, 5.0))
    d2 = jnp.sum((g_h[None, :, :] - g_h[:, None, :]) ** 2, axis=-1)
    distance = jnp.exp(jnp.clip(-jnp.sqrt(d2 + 1e-6) * inv, -5.0, 5.0))
    w = score_e * distance * mask
    wv_ = w @ v
    z = jnp.sum(score_e * mask, axis=-1, keepdims=True)
    return jnp.where(z > 0.0, wv_ / z, wv_)


if __name__ == "__main__":
    in_dim, out_dim, num_heads, n_neigh = 32, 32, 1, 8

    key = jax.random.PRNGKey(0)
    k_h, k_q, k_k, k_v, k_g = jax.random.split(key, 5)
    bound = 1.0 / math.sqrt(in_dim)           # nn.Linear default uniform init
    wq = jax.random.uniform(k_q, (in_dim, out_dim * num_heads), jnp.float32, -bound, bound)
    wk = jax.random.uniform(k_k, (in_dim, out_dim * num_heads), jnp.float32, -bound, bound)
    wv = jax.random.uniform(k_v, (in_dim, out_dim * num_heads), jnp.float32, -bound, bound)
    wg = jax.random.uniform(k_g, (in_dim, 3 * num_heads), jnp.float32, -bound, bound)

    # single-tile case, multi-tile case (exercises the occupancy skip on a 4x4
    # grid), and a bf16-MXU case (v5e/v6e/v7x production setting, loose tol).
    cases = [
        (64, 128, 128, jnp.float32, 2e-3),
        (512, 128, 128, jnp.float32, 2e-3),
        (512, 256, 256, jnp.bfloat16, 2.5e-1),
    ]
    for n, tq, tk, mdt, tol in cases:
        h = jax.random.normal(jax.random.fold_in(k_h, n), (n, in_dim), jnp.float32)

        head_out = multi_head_attention(h, wq, wk, wv, wg, n_neigh=n_neigh,
                                        out_dim=out_dim, num_heads=num_heads,
                                        tile_q=tq, tile_k=tk, mxu_dtype=mdt)
        head_out = jax.block_until_ready(head_out)
        assert head_out.shape == (n, num_heads, out_dim)
        assert bool(jnp.all(jnp.isfinite(head_out)))

        # reference uses exactly the same neighbour table as the kernel wrapper
        g_h = h @ wg
        nbr_idx = _knn_indices(g_h, n_neigh)
        mask = jnp.zeros((n, n), jnp.float32).at[
            jnp.arange(n)[:, None], nbr_idx].set(1.0)
        ref = _reference(h, wq, wk, wv, g_h, mask, out_dim).reshape(
            n, num_heads, out_dim)
        err = float(jnp.max(jnp.abs(head_out - ref)))
        assert jnp.allclose(head_out, ref, atol=tol, rtol=tol), err

    print("KERNEL_OK")
</pallas_src>

<mosaic_0001>
module attributes {stable_mosaic.version = 11 : i64} {
  func.func @_mha_kernel(%arg0: i32, %arg1: i32, %arg2: memref<1x1xi32, #tpu.memory_space<smem>>, %arg3: memref<1x1xi32, #tpu.memory_space<smem>>, %arg4: memref<128x8xi32, #tpu.memory_space<vmem>>, %arg5: memref<128x128xf32, #tpu.memory_space<vmem>>, %arg6: memref<128x256xf32, #tpu.memory_space<vmem>>, %arg7: memref<128x8xf32, #tpu.memory_space<vmem>>, %arg8: memref<8x128xf32, #tpu.memory_space<vmem>>, %arg9: memref<128x1xf32, #tpu.memory_space<vmem>>, %arg10: memref<1x128xf32, #tpu.memory_space<vmem>>, %arg11: memref<128x128xf32, #tpu.memory_space<vmem>>, %arg12: memref<128x128xf32, #tpu.memory_space<vmem>>, %arg13: memref<128x1xf32, #tpu.memory_space<vmem>>) attributes {dimension_semantics = [#tpu.dimension_semantics<parallel>, #tpu.dimension_semantics<arbitrary>], iteration_bounds = array<i64: 1, 1>, scalar_prefetch = 2 : i64, scratch_operands = 2 : i64, tpu.core_type = #tpu.core_type<tc>, window_params = [{transform_indices = @transform_0, window_bounds = array<i64: 128, 8>}, {transform_indices = @transform_1, window_bounds = array<i64: 128, 128>}, {transform_indices = @transform_2, window_bounds = array<i64: 128, 256>}, {transform_indices = @transform_3, window_bounds = array<i64: 128, 8>}, {transform_indices = @transform_4, window_bounds = array<i64: 8, 128>}, {transform_indices = @transform_5, window_bounds = array<i64: 128, 1>}, {transform_indices = @transform_6, window_bounds = array<i64: 1, 128>}, {transform_indices = @transform_7, window_bounds = array<i64: 128, 128>}]} {
    %c0_i32 = arith.constant 0 : i32
    %0 = arith.cmpi eq, %arg1, %c0_i32 : i32
    %1 = arith.extui %0 : i1 to i32
    %c0_i32_0 = arith.constant 0 : i32
    %2 = arith.cmpi ne, %1, %c0_i32_0 : i32
    scf.if %2 {
      %cst = arith.constant 0.000000e+00 : f32
      %12 = vector.broadcast %cst : f32 to vector<128x128xf32>
      %c0 = arith.constant 0 : index
      %c0_5 = arith.constant 0 : index
      %13 = vector.load %arg12[%c0, %c0_5] : memref<128x128xf32, #tpu.memory_space<vmem>>, vector<128x128xf32>
      tpu.vector_store %arg12[%c0, %c0_5], %12 {strides = array<i32>} : memref<128x128xf32, #tpu.memory_space<vmem>>, vector<128x128xf32>,
      %cst_6 = arith.constant 0.000000e+00 : f32
      %14 = vector.broadcast %cst_6 : f32 to vector<128x1xf32>
      %c0_7 = arith.constant 0 : index
      %c0_8 = arith.constant 0 : index
      %15 = vector.load %arg13[%c0_7, %c0_8] : memref<128x1xf32, #tpu.memory_space<vmem>>, vector<128x1xf32>
      tpu.vector_store %arg13[%c0_7, %c0_8], %14 {strides = array<i32>} : memref<128x1xf32, #tpu.memory_space<vmem>>, vector<128x1xf32>,
    } else {
    }
    %3 = arith.index_cast %arg0 : i32 to index
    %4 = arith.index_cast %arg1 : i32 to index
    %5 = memref.load %arg2[%3, %4] : memref<1x1xi32, #tpu.memory_space<smem>>
    %c0_i32_1 = arith.constant 0 : i32
    %6 = arith.cmpi ne, %5, %c0_i32_1 : i32
    %7 = arith.extui %6 : i1 to i32
    %c0_i32_2 = arith.constant 0 : i32
    %8 = arith.cmpi ne, %7, %c0_i32_2 : i32
    scf.if %8 {
      %c0 = arith.constant 0 : index
      %c0_5 = arith.constant 0 : index
      %12 = vector.load %arg6[%c0, %c0_5] : memref<128x256xf32, #tpu.memory_space<vmem>>, vector<128x256xf32>
      %13 = vector.extract_strided_slice %12 {offsets = [0, 0], sizes = [128, 128], strides = [1, 1]} : vector<128x256xf32> to vector<128x128xf32>
      %14 = vector.extract_strided_slice %12 {offsets = [0, 128], sizes = [128, 128], strides = [1, 1]} : vector<128x256xf32> to vector<128x128xf32>
      %c0_6 = arith.constant 0 : index
      %c0_7 = arith.constant 0 : index
      %15 = vector.load %arg5[%c0_6, %c0_7] : memref<128x128xf32, #tpu.memory_space<vmem>>, vector<128x128xf32>
      %cst = arith.constant dense<0.000000e+00> : vector<128x128xf32>
      %16 = tpu.matmul %15, %13, %cst {dimension_numbers = #tpu.dot_dimension_numbers<[1], [1], [0], [0], [0, 0, 1, 0], [], []>} : vector<128x128xf32>, vector<128x128xf32>, vector<128x128xf32> -> vector<128x128xf32>
      %cst_8 = arith.constant 0.176776692 : f32
      %17 = vector.broadcast %cst_8 : f32 to vector<128x128xf32>
      %18 = arith.mulf %16, %17 : vector<128x128xf32>
      %cst_9 = arith.constant -5.000000e+00 : f32
      %cst_10 = arith.constant 5.000000e+00 : f32
      %19 = vector.broadcast %cst_9 : f32 to vector<128x128xf32>
      %20 = arith.maximumf %19, %18 : vector<128x128xf32>
      %21 = vector.broadcast %cst_10 : f32 to vector<128x128xf32>
      %22 = arith.minimumf %21, %20 : vector<128x128xf32>
      %23 = math.exp %22 : vector<128x128xf32>
      %c128_i32 = arith.constant 128 : i32
      %24 = arith.muli %c128_i32, %arg1 : i32
      %25 = tpu.iota {dimensions = array<i32: 1>} : vector<128x128xi32>
      %26 = vector.broadcast %24 : i32 to vector<128x128xi32>
      %27 = arith.addi %26, %25 : vector<128x128xi32>
      %c0_11 = arith.constant 0 : index
      %c0_12 = arith.constant 0 : index
      %28 = vector.load %arg4[%c0_11, %c0_12] : memref<128x8xi32, #tpu.memory_space<vmem>>, vector<128x8xi32>
      %29 = vector.extract_strided_slice %28 {offsets = [0, 0], sizes = [128, 1], strides = [1, 1]} : vector<128x8xi32> to vector<128x1xi32>
      %30 = vector.broadcast %29 : vector<128x1xi32> to vector<128x128xi32>
      %31 = arith.cmpi eq, %27, %30 : vector<128x128xi32>
      %32 = vector.extract_strided_slice %28 {offsets = [0, 1], sizes = [128, 1], strides = [1, 1]} : vector<128x8xi32> to vector<128x1xi32>
      %33 = vector.broadcast %32 : vector<128x1xi32> to vector<128x128xi32>
      %34 = arith.cmpi eq, %27, %33 : vector<128x128xi32>
      %35 = arith.ori %31, %34 : vector<128x128xi1>
      %36 = vector.extract_strided_slice %28 {offsets = [0, 2], sizes = [128, 1], strides = [1, 1]} : vector<128x8xi32> to vector<128x1xi32>
      %37 = vector.broadcast %36 : vector<128x1xi32> to vector<128x128xi32>
      %38 = arith.cmpi eq, %27, %37 : vector<128x128xi32>
      %39 = arith.ori %35, %38 : vector<128x128xi1>
      %40 = vector.extract_strided_slice %28 {offsets = [0, 3], sizes = [128, 1], strides = [1, 1]} : vector<128x8xi32> to vector<128x1xi32>
      %41 = vector.broadcast %40 : vector<128x1xi32> to vector<128x128xi32>
      %42 = arith.cmpi eq, %27, %41 : vector<128x128xi32>
      %43 = arith.ori %39, %42 : vector<128x128xi1>
      %44 = vector.extract_strided_slice %28 {offsets = [0, 4], sizes = [128, 1], strides = [1, 1]} : vector<128x8xi32> to vector<128x1xi32>
      %45 = vector.broadcast %44 : vector<128x1xi32> to vector<128x128xi32>
      %46 = arith.cmpi eq, %27, %45 : vector<128x128xi32>
      %47 = arith.ori %43, %46 : vector<128x128xi1>
      %48 = vector.extract_strided_slice %28 {offsets = [0, 5], sizes = [128, 1], strides = [1, 1]} : vector<128x8xi32> to vector<128x1xi32>
      %49 = vector.broadcast %48 : vector<128x1xi32> to vector<128x128xi32>
      %50 = arith.cmpi eq, %27, %49 : vector<128x128xi32>
      %51 = arith.ori %47, %50 : vector<128x128xi1>
      %52 = vector.extract_strided_slice %28 {offsets = [0, 6], sizes = [128, 1], strides = [1, 1]} : vector<128x8xi32> to vector<128x1xi32>
      %53 = vector.broadcast %52 : vector<128x1xi32> to vector<128x128xi32>
      %54 = arith.cmpi eq, %27, %53 : vector<128x128xi32>
      %55 = arith.ori %51, %54 : vector<128x128xi1>
      %56 = vector.extract_strided_slice %28 {offsets = [0, 7], sizes = [128, 1], strides = [1, 1]} : vector<128x8xi32> to vector<128x1xi32>
      %57 = vector.broadcast %56 : vector<128x1xi32> to vector<128x128xi32>
      %58 = arith.cmpi eq, %27, %57 : vector<128x128xi32>
      %59 = arith.ori %55, %58 : vector<128x128xi1>
      %cst_13 = arith.constant 0.000000e+00 : f32
      %60 = vector.broadcast %cst_13 : f32 to vector<128x128xf32>
      %61 = arith.select %59, %23, %60 : vector<128x128xi1>, vector<128x128xf32>
      %c0_14 = arith.constant 0 : index
      %c0_15 = arith.constant 0 : index
      %62 = vector.load %arg7[%c0_14, %c0_15] : memref<128x8xf32, #tpu.memory_space<vmem>>, vector<128x8xf32>
      %c0_16 = arith.constant 0 : index
      %c0_17 = arith.constant 0 : index
      %63 = vector.load %arg8[%c0_16, %c0_17] : memref<8x128xf32, #tpu.memory_space<vmem>>, vector<8x128xf32>
      %cst_18 = arith.constant dense<0.000000e+00> : vector<128x128xf32>
      %64 = tpu.matmul %62, %63, %cst_18 {dimension_numbers = #tpu.dot_dimension_numbers<[1], [0], [0], [1], [0, 0, 1, 1], [], []>} : vector<128x8xf32>, vector<8x128xf32>, vector<128x128xf32> -> vector<128x128xf32>
      %c0_19 = arith.constant 0 : index
      %c0_20 = arith.constant 0 : index
      %65 = vector.load %arg9[%c0_19, %c0_20] : memref<128x1xf32, #tpu.memory_space<vmem>>, vector<128x1xf32>
      %c0_21 = arith.constant 0 : index
      %c0_22 = arith.constant 0 : index
      %66 = vector.load %arg10[%c0_21, %c0_22] : memref<1x128xf32, #tpu.memory_space<vmem>>, vector<1x128xf32>
      %67 = vector.broadcast %65 : vector<128x1xf32> to vector<128x128xf32>
      %68 = vector.broadcast %66 : vector<1x128xf32> to vector<128x128xf32>
      %69 = arith.addf %67, %68 : vector<128x128xf32>
      %cst_23 = arith.constant 2.000000e+00 : f32
      %70 = vector.broadcast %cst_23 : f32 to vector<128x128xf32>
      %71 = arith.mulf %70, %64 : vector<128x128xf32>
      %72 = arith.subf %69, %71 : vector<128x128xf32>
      %cst_24 = arith.constant 0.000000e+00 : f32
      %73 = vector.broadcast %cst_24 : f32 to vector<128x128xf32>
      %74 = arith.maximumf %72, %73 : vector<128x128xf32>
      %cst_25 = arith.constant 9.99999997E-7 : f32
      %75 = vector.broadcast %cst_25 : f32 to vector<128x128xf32>
      %76 = arith.addf %74, %75 : vector<128x128xf32>
      %77 = math.sqrt %76 : vector<128x128xf32>
      %cst_26 = arith.constant 0.000000e+00 : f32
      %78 = vector.broadcast %cst_26 : f32 to vector<128x128xf32>
      %79 = arith.subf %78, %77 : vector<128x128xf32>
      %cst_27 = arith.constant 0.176776692 : f32
      %80 = vector.broadcast %cst_27 : f32 to vector<128x128xf32>
      %81 = arith.mulf %79, %80 : vector<128x128xf32>
      %cst_28 = arith.constant -5.000000e+00 : f32
      %82 = vector.broadcast %cst_28 : f32 to vector<128x128xf32>
      %83 = arith.maximumf %81, %82 : vector<128x128xf32>
      %84 = math.exp %83 : vector<128x128xf32>
      %85 = arith.mulf %61, %84 : vector<128x128xf32>
      %c0_29 = arith.constant 0 : index
      %c0_30 = arith.constant 0 : index
      %86 = vector.load %arg12[%c0_29, %c0_30] : memref<128x128xf32, #tpu.memory_space<vmem>>, vector<128x128xf32>
      %cst_31 = arith.constant dense<0.000000e+00> : vector<128x128xf32>
      %87 = tpu.matmul %85, %14, %cst_31 {dimension_numbers = #tpu.dot_dimension_numbers<[1], [0], [0], [1], [0, 0, 1, 1], [], []>} : vector<128x128xf32>, vector<128x128xf32>, vector<128x128xf32> -> vector<128x128xf32>
      %88 = arith.addf %86, %87 : vector<128x128xf32>
      %c0_32 = arith.constant 0 : index
      %c0_33 = arith.constant 0 : index
      %89 = vector.load %arg12[%c0_32, %c0_33] : memref<128x128xf32, #tpu.memory_space<vmem>>, vector<128x128xf32>
      tpu.vector_store %arg12[%c0_32, %c0_33], %88 {strides = array<i32>} : memref<128x128xf32, #tpu.memory_space<vmem>>, vector<128x128xf32>,
      %c0_34 = arith.constant 0 : index
      %c0_35 = arith.constant 0 : index
      %90 = vector.load %arg13[%c0_34, %c0_35] : memref<128x1xf32, #tpu.memory_space<vmem>>, vector<128x1xf32>
      %cst_36 = arith.constant dense<0.000000e+00> : vector<128xf32>
      %91 = vector.multi_reduction <add>, %61, %cst_36 [1] : vector<128x128xf32> to vector<128xf32>
      %92 = vector.shape_cast %91 : vector<128xf32> to vector<128x1xf32>
      %93 = arith.addf %90, %92 : vector<128x1xf32>
      %c0_37 = arith.constant 0 : index
      %c0_38 = arith.constant 0 : index
      %94 = vector.load %arg13[%c0_37, %c0_38] : memref<128x1xf32, #tpu.memory_space<vmem>>, vector<128x1xf32>
      tpu.vector_store %arg13[%c0_37, %c0_38], %93 {strides = array<i32>} : memref<128x1xf32, #tpu.memory_space<vmem>>, vector<128x1xf32>,
    } else {
    }
    %c0_i32_3 = arith.constant 0 : i32
    %9 = arith.cmpi eq, %arg1, %c0_i32_3 : i32
    %10 = arith.extui %9 : i1 to i32
    %c0_i32_4 = arith.constant 0 : i32
    %11 = arith.cmpi ne, %10, %c0_i32_4 : i32
    scf.if %11 {
      %c0 = arith.constant 0 : index
      %c0_5 = arith.constant 0 : index
      %12 = vector.load %arg13[%c0, %c0_5] : memref<128x1xf32, #tpu.memory_space<vmem>>, vector<128x1xf32>
      %cst = arith.constant 1.000000e-30 : f32
      %13 = vector.broadcast %cst : f32 to vector<128x1xf32>
      %14 = arith.maximumf %12, %13 : vector<128x1xf32>
      %15 = tpu.reciprocal %14 : vector<128x1xf32> -> vector<128x1xf32>
      %cst_6 = arith.constant 0.000000e+00 : f32
      %16 = vector.broadcast %cst_6 : f32 to vector<128x1xf32>
      %17 = arith.cmpf ogt, %12, %16 : vector<128x1xf32>
      %c0_7 = arith.constant 0 : index
      %c0_8 = arith.constant 0 : index
      %18 = vector.load %arg12[%c0_7, %c0_8] : memref<128x128xf32, #tpu.memory_space<vmem>>, vector<128x128xf32>
      %19 = vector.broadcast %15 : vector<128x1xf32> to vector<128x128xf32>
      %20 = arith.mulf %18, %19 : vector<128x128xf32>
      %c0_9 = arith.constant 0 : index
      %c0_10 = arith.constant 0 : index
      %21 = vector.load %arg12[%c0_9, %c0_10] : memref<128x128xf32, #tpu.memory_space<vmem>>, vector<128x128xf32>
      %22 = vector.shape_cast %17 : vector<128x1xi1> to vector<128x1xi1>
      %23 = vector.broadcast %22 : vector<128x1xi1> to vector<128x128xi1>
      %24 = arith.select %23, %20, %21 : vector<128x128xi1>, vector<128x128xf32>
      %c0_11 = arith.constant 0 : index
      %c0_12 = arith.constant 0 : index
      %25 = vector.load %arg11[%c0_11, %c0_12] : memref<128x128xf32, #tpu.memory_space<vmem>>, vector<128x128xf32>
      tpu.vector_store %arg11[%c0_11, %c0_12], %24 {strides = array<i32>} : memref<128x128xf32, #tpu.memory_space<vmem>>, vector<128x128xf32>,
    } else {
    }
    return
  }
  func.func @transform_0(%arg0: i32, %arg1: i32, %arg2: memref<1x1xi32, #tpu.memory_space<smem>>, %arg3: memref<1x1xi32, #tpu.memory_space<smem>>) -> (i32, i32) {
    %c0_i32 = arith.constant 0 : i32
    %c0_i32_0 = arith.constant 0 : i32
    return %arg0, %c0_i32 : i32, i32
  }
  func.func @transform_1(%arg0: i32, %arg1: i32, %arg2: memref<1x1xi32, #tpu.memory_space<smem>>, %arg3: memref<1x1xi32, #tpu.memory_space<smem>>) -> (i32, i32) {
    %c0_i32 = arith.constant 0 : i32
    %c0_i32_0 = arith.constant 0 : i32
    return %arg0, %c0_i32 : i32, i32
  }
  func.func @transform_2(%arg0: i32, %arg1: i32, %arg2: memref<1x1xi32, #tpu.memory_space<smem>>, %arg3: memref<1x1xi32, #tpu.memory_space<smem>>) -> (i32, i32) {
    %0 = arith.index_cast %arg0 : i32 to index
    %1 = arith.index_cast %arg1 : i32 to index
    %2 = memref.load %arg3[%0, %1] : memref<1x1xi32, #tpu.memory_space<smem>>
    %c0_i32 = arith.constant 0 : i32
    %c0_i32_0 = arith.constant 0 : i32
    return %2, %c0_i32 : i32, i32
  }
  func.func @transform_3(%arg0: i32, %arg1: i32, %arg2: memref<1x1xi32, #tpu.memory_space<smem>>, %arg3: memref<1x1xi32, #tpu.memory_space<smem>>) -> (i32, i32) {
    %c0_i32 = arith.constant 0 : i32
    %c0_i32_0 = arith.constant 0 : i32
    return %arg0, %c0_i32 : i32, i32
  }
  func.func @transform_4(%arg0: i32, %arg1: i32, %arg2: memref<1x1xi32, #tpu.memory_space<smem>>, %arg3: memref<1x1xi32, #tpu.memory_space<smem>>) -> (i32, i32) {
    %0 = arith.index_cast %arg0 : i32 to index
    %1 = arith.index_cast %arg1 : i32 to index
    %2 = memref.load %arg3[%0, %1] : memref<1x1xi32, #tpu.memory_space<smem>>
    %c0_i32 = arith.constant 0 : i32
    %c0_i32_0 = arith.constant 0 : i32
    return %c0_i32, %2 : i32, i32
  }
  func.func @transform_5(%arg0: i32, %arg1: i32, %arg2: memref<1x1xi32, #tpu.memory_space<smem>>, %arg3: memref<1x1xi32, #tpu.memory_space<smem>>) -> (i32, i32) {
    %c0_i32 = arith.constant 0 : i32
    %c0_i32_0 = arith.constant 0 : i32
    return %arg0, %c0_i32 : i32, i32
  }
  func.func @transform_6(%arg0: i32, %arg1: i32, %arg2: memref<1x1xi32, #tpu.memory_space<smem>>, %arg3: memref<1x1xi32, #tpu.memory_space<smem>>) -> (i32, i32) {
    %0 = arith.index_cast %arg0 : i32 to index
    %1 = arith.index_cast %arg1 : i32 to index
    %2 = memref.load %arg3[%0, %1] : memref<1x1xi32, #tpu.memory_space<smem>>
    %c0_i32 = arith.constant 0 : i32
    %c0_i32_0 = arith.constant 0 : i32
    return %c0_i32, %2 : i32, i32
  }
  func.func @transform_7(%arg0: i32, %arg1: i32, %arg2: memref<1x1xi32, #tpu.memory_space<smem>>, %arg3: memref<1x1xi32, #tpu.memory_space<smem>>) -> (i32, i32) {
    %c0_i32 = arith.constant 0 : i32
    %c0_i32_0 = arith.constant 0 : i32
    return %arg0, %c0_i32 : i32, i32
  }
}

</mosaic_0001>

<llo_original>
// kernel: tpu_custom_call.1
$region0: #{tpu_custom_call.1}
  #allocation0 [shape = 'u32[]', space=smem, size = 0x4, offset = 0x4, fixed_abs, tag = 'smem constant byte address 0x4 - core index']
  #allocation1 [shape = 'u32[144,128]{1,0:T(1,128)}', space=vmem, size = 0x12000, scoped, tag = 'internal scratch']
  #allocation2 [shape = 'f32[128,128]{1,0:T(8,128)}', space=vmem, size = 0x10000, scoped, tag = 'scratch operand']
  #allocation3 [shape = 'f32[128,1]{1,0:T(8,128)}', space=vmem, size = 0x10000, scoped, tag = 'scratch operand']
  #allocation4 [shape = 's32[1]{0}', space=sflag, size = 0x4, scoped, tag = 'scoped memory for tpu_custom_call.1']
  #allocation5 [shape = 's32[1,1]{1,0:T(1,128)S(6)}', space=smem, size = 0x200, scoped, tag = 'prefetched SMEM operand 0']
  #allocation6 [shape = 's32[1,1]{1,0:T(1,128)S(6)}', space=smem, size = 0x200, scoped, tag = 'prefetched SMEM operand 1']
  %s0 = inlined_call_operand.<no memory space> [shape: s32[1,1], index: 0, kind: input, shape index: {}]
  %s1 = inlined_call_operand.<no memory space> [shape: s32[1,1], index: 1, kind: input, shape index: {}]
  %s2 = inlined_call_operand.vmem [shape: s32[128,8], index: 2, kind: input, shape index: {}]
  %s3 = inlined_call_operand.vmem [shape: f32[128,128], index: 3, kind: input, shape index: {}]
  %s4 = inlined_call_operand.vmem [shape: f32[128,256], index: 4, kind: input, shape index: {}]
  %s5 = inlined_call_operand.vmem [shape: f32[128,8], index: 5, kind: input, shape index: {}]
  %s6 = inlined_call_operand.vmem [shape: f32[8,128], index: 6, kind: input, shape index: {}]
  %s7 = inlined_call_operand.vmem [shape: f32[128,1], index: 7, kind: input, shape index: {}]
  %s8 = inlined_call_operand.vmem [shape: f32[1,128], index: 8, kind: input, shape index: {}]
  %s9 = inlined_call_operand.hbm [shape: f32[128,128], index: 9, kind: output, shape index: {}]
  %s10 = sld [smem:[#allocation0]]
  $region50: #{tpu_custom_call.1} parent=0
    _
  %s12 = ssub.s32 1, %s10
  %s13 = scalar_select 0, %s12, %s10
  %14 = sst [smem:[#allocation5]] %s0
  %15 = sst [smem:[#allocation6]] %s1
  $region1: #{tpu_custom_call.1} parent=0
    #allocation7 [shape = 'u8[65536]{0}', space=vmem, size = 0x10000, scoped, tag = 'output window, operand 0, single buffered']
    #allocation8 [shape = 's32[1]{0}', space=sflag, size = 0x4, scoped, tag = 'scoped memory for tpu_custom_call.1']
    %16 = vsyncpa [#allocation8], 0
    // Predicated region
    $region2: #{tpu_custom_call.1} parent=1 // pred_check
      _
    $region3: #{tpu_custom_call.1} parent=1 // pred_check_branch
      %18 = sbr.rel (0) target = $region5
    $region4: #{tpu_custom_call.1} parent=1 // pred_region
      _
    $region5: #{tpu_custom_call.1} parent=1 // pred_fallthru
      _
    // Predicated region
    $region6: #{tpu_custom_call.1} parent=1 // pred_check
      _
    $region7: #{tpu_custom_call.1} parent=1 // pred_check_branch
      %20 = sbr.rel (0) target = $region9
    $region8: #{tpu_custom_call.1} parent=1 // pred_region
      _
    $region9: #{tpu_custom_call.1} parent=1 // pred_fallthru
      _
    // Predicated region
    $region10: #{tpu_custom_call.1} parent=1 // pred_check
      _
    $region11: #{tpu_custom_call.1} parent=1 // pred_check_branch
      %22 = sbr.rel (0) target = $region13
    $region12: #{tpu_custom_call.1} parent=1 // pred_region
      %s23 = sadd.s32 0, 0
      %s24 = smul.u32 %s23, 128
      %s25 = sadd.s32 %s24, 0
      %s26 = sld [smem:[#allocation6 + %s25]]
      %s27 = smul.u32 16, %s26
      %p28 = scmp.lt.s32.totalorder %s27, 15
      %s29 = scalar_select %p28, %s27, 15
      %s30 = smul.addr %s29, 2
      %s31 = smul.addr %s30, 8
      %s32 = scalar_lea.vmem %s4, %s31
      %s33 = sadd.s32 0, 0
      %s34 = smul.u32 %s33, 128
      %s35 = sadd.s32 %s34, 0
      %s36 = sld [smem:[#allocation6 + %s35]]
      %s37 = smul.u32 16, %s36
    $region13: #{tpu_custom_call.1} parent=1 // pred_fallthru
      _
    // Predicated region
    $region14: #{tpu_custom_call.1} parent=1 // pred_check
      _
    $region15: #{tpu_custom_call.1} parent=1 // pred_check_branch
      %39 = sbr.rel (0) target = $region17
    $region16: #{tpu_custom_call.1} parent=1 // pred_region
      _
    $region17: #{tpu_custom_call.1} parent=1 // pred_fallthru
      _
    // Predicated region
    $region18: #{tpu_custom_call.1} parent=1 // pred_check
      _
    $region19: #{tpu_custom_call.1} parent=1 // pred_check_branch
      %41 = sbr.rel (0) target = $region21
    $region20: #{tpu_custom_call.1} parent=1 // pred_region
      %s42 = sadd.s32 0, 0
      %s43 = smul.u32 %s42, 128
      %s44 = sadd.s32 %s43, 0
      %s45 = sld [smem:[#allocation6 + %s44]]
      %p46 = scmp.lt.s32.totalorder %s45, 0
      %s47 = scalar_select %p46, %s45, 0
      %s48 = smul.addr %s47, 8
      %s49 = scalar_lea.vmem %s6, %s48
      %s50 = sadd.s32 0, 0
      %s51 = smul.u32 %s50, 128
      %s52 = sadd.s32 %s51, 0
      %s53 = sld [smem:[#allocation6 + %s52]]
    $region21: #{tpu_custom_call.1} parent=1 // pred_fallthru
      _
    // Predicated region
    $region22: #{tpu_custom_call.1} parent=1 // pred_check
      _
    $region23: #{tpu_custom_call.1} parent=1 // pred_check_branch
      %55 = sbr.rel (0) target = $region25
    $region24: #{tpu_custom_call.1} parent=1 // pred_region
      _
    $region25: #{tpu_custom_call.1} parent=1 // pred_fallthru
      _
    // Predicated region
    $region26: #{tpu_custom_call.1} parent=1 // pred_check
      _
    $region27: #{tpu_custom_call.1} parent=1 // pred_check_branch
      %57 = sbr.rel (0) target = $region29
    $region28: #{tpu_custom_call.1} parent=1 // pred_region
      %s58 = sadd.s32 0, 0
      %s59 = smul.u32 %s58, 128
      %s60 = sadd.s32 %s59, 0
      %s61 = sld [smem:[#allocation6 + %s60]]
      %p62 = scmp.lt.s32.totalorder %s61, 0
      %s63 = scalar_select %p62, %s61, 0
      %s64 = scalar_lea.vmem %s8, %s63
      %s65 = sadd.s32 0, 0
      %s66 = smul.u32 %s65, 128
      %s67 = sadd.s32 %s66, 0
      %s68 = sld [smem:[#allocation6 + %s67]]
    $region29: #{tpu_custom_call.1} parent=1 // pred_fallthru
      _
    %s69 = sadd.s32 0, 0
    %s70 = smul.u32 %s69, 128
    %s71 = sadd.s32 %s70, 0
    %s72 = sld [smem:[#allocation6 + %s71]]
    %s73 = smul.u32 16, %s72
    %p74 = scmp.lt.s32.totalorder %s73, 15
    %s75 = scalar_select %p74, %s73, 15
    %s76 = smul.addr %s75, 2
    %s77 = smul.addr %s76, 8
    %s78 = scalar_lea.vmem %s4, %s77
    %s79 = sadd.s32 0, 0
    %s80 = smul.u32 %s79, 128
    %s81 = sadd.s32 %s80, 0
    %s82 = sld [smem:[#allocation6 + %s81]]
    %p83 = scmp.lt.s32.totalorder %s82, 0
    %s84 = scalar_select %p83, %s82, 0
    %s85 = smul.addr %s84, 8
    %s86 = scalar_lea.vmem %s6, %s85
    %s87 = sadd.s32 0, 0
    %s88 = smul.u32 %s87, 128
    %s89 = sadd.s32 %s88, 0
    %s90 = sld [smem:[#allocation6 + %s89]]
    %p91 = scmp.lt.s32.totalorder %s90, 0
    %s92 = scalar_select %p91, %s90, 0
    %s93 = scalar_lea.vmem %s8, %s92
    %s94 = sadd.s32 0, 0
    %s95 = smul.u32 %s94, 128
    %s96 = sadd.s32 %s95, 0
    %s97 = sld [smem:[#allocation6 + %s96]]
    %s98 = smul.u32 16, %s97
    %p99 = scmp.lt.s32.totalorder %s98, 15
    %s100 = scalar_select %p99, %s98, 15
    %s101 = smul.addr %s100, 2
    %s102 = smul.addr %s101, 8
    %s103 = scalar_lea.vmem %s4, %s102
    %s104 = sadd.s32 0, 0
    %s105 = smul.u32 %s104, 128
    %s106 = sadd.s32 %s105, 0
    %s107 = sld [smem:[#allocation6 + %s106]]
    %s108 = smul.u32 16, %s107
    %s109 = sadd.s32 0, 0
    %s110 = smul.u32 %s109, 128
    %s111 = sadd.s32 %s110, 0
    %s112 = sld [smem:[#allocation6 + %s111]]
    %p113 = scmp.lt.s32.totalorder %s112, 0
    %s114 = scalar_select %p113, %s112, 0
    %s115 = smul.addr %s114, 8
    %s116 = scalar_lea.vmem %s6, %s115
    %s117 = sadd.s32 0, 0
    %s118 = smul.u32 %s117, 128
    %s119 = sadd.s32 %s118, 0
    %s120 = sld [smem:[#allocation6 + %s119]]
    %s121 = sadd.s32 0, 0
    %s122 = smul.u32 %s121, 128
    %s123 = sadd.s32 %s122, 0
    %s124 = sld [smem:[#allocation6 + %s123]]
    %p125 = scmp.lt.s32.totalorder %s124, 0
    %s126 = scalar_select %p125, %s124, 0
    %s127 = scalar_lea.vmem %s8, %s126
    %s128 = sadd.s32 0, 0
    %s129 = smul.u32 %s128, 128
    %s130 = sadd.s32 %s129, 0
    %s131 = sld [smem:[#allocation6 + %s130]]
    %p132 = scmp.eq.s32.totalorder 0, 0
    // Predicated region
    $region30: #{tpu_custom_call.1} parent=1 // pred_check
      %p133 = pneg %p132
    $region31: #{tpu_custom_call.1} parent=1 // pred_check_branch
      %135 = sbr.rel (%p133) target = $region33
    $region32: #{tpu_custom_call.1} parent=1 // pred_region
      %136 = vst [vmem:[#allocation2] sm:$0xff] 0.0
      %137 = vst [vmem:[#allocation2 + $0x8] sm:$0xff] 0.0
      %138 = vst [vmem:[#allocation2 + $0x10] sm:$0xff] 0.0
      %139 = vst [vmem:[#allocation2 + $0x18] sm:$0xff] 0.0
      %140 = vst [vmem:[#allocation2 + $0x20] sm:$0xff] 0.0
      %141 = vst [vmem:[#allocation2 + $0x28] sm:$0xff] 0.0
      %142 = vst [vmem:[#allocation2 + $0x30] sm:$0xff] 0.0
      %143 = vst [vmem:[#allocation2 + $0x38] sm:$0xff] 0.0
      %144 = vst [vmem:[#allocation2 + $0x40] sm:$0xff] 0.0
      %145 = vst [vmem:[#allocation2 + $0x48] sm:$0xff] 0.0
      %146 = vst [vmem:[#allocation2 + $0x50] sm:$0xff] 0.0
      %147 = vst [vmem:[#allocation2 + $0x58] sm:$0xff] 0.0
      %148 = vst [vmem:[#allocation2 + $0x60] sm:$0xff] 0.0
      %149 = vst [vmem:[#allocation2 + $0x68] sm:$0xff] 0.0
      %150 = vst [vmem:[#allocation2 + $0x70] sm:$0xff] 0.0
      %151 = vst [vmem:[#allocation2 + $0x78] sm:$0xff] 0.0
      %vm152 = vcmask 7168
      %153 = vst.msk [vmem:[#allocation3] sm:$0xff] %vm152, 0.0
      %154 = vst.msk [vmem:[#allocation3 + $0x8] sm:$0xff] %vm152, 0.0
      %155 = vst.msk [vmem:[#allocation3 + $0x10] sm:$0xff] %vm152, 0.0
      %156 = vst.msk [vmem:[#allocation3 + $0x18] sm:$0xff] %vm152, 0.0
      %157 = vst.msk [vmem:[#allocation3 + $0x20] sm:$0xff] %vm152, 0.0
      %158 = vst.msk [vmem:[#allocation3 + $0x28] sm:$0xff] %vm152, 0.0
      %159 = vst.msk [vmem:[#allocation3 + $0x30] sm:$0xff] %vm152, 0.0
      %160 = vst.msk [vmem:[#allocation3 + $0x38] sm:$0xff] %vm152, 0.0
      %161 = vst.msk [vmem:[#allocation3 + $0x40] sm:$0xff] %vm152, 0.0
      %162 = vst.msk [vmem:[#allocation3 + $0x48] sm:$0xff] %vm152, 0.0
      %163 = vst.msk [vmem:[#allocation3 + $0x50] sm:$0xff] %vm152, 0.0
      %164 = vst.msk [vmem:[#allocation3 + $0x58] sm:$0xff] %vm152, 0.0
      %165 = vst.msk [vmem:[#allocation3 + $0x60] sm:$0xff] %vm152, 0.0
      %166 = vst.msk [vmem:[#allocation3 + $0x68] sm:$0xff] %vm152, 0.0
      %167 = vst.msk [vmem:[#allocation3 + $0x70] sm:$0xff] %vm152, 0.0
      %168 = vst.msk [vmem:[#allocation3 + $0x78] sm:$0xff] %vm152, 0.0
    $region33: #{tpu_custom_call.1} parent=1 // pred_fallthru
      _
    %s169 = sadd.s32 0, 0
    %s170 = smul.u32 %s169, 128
    %s171 = sadd.s32 %s170, 0
    %s172 = sld [smem:[#allocation5 + %s171]]
    %p173 = scmp.ne.s32.totalorder %s172, 0
    // Predicated region
    $region34: #{tpu_custom_call.1} parent=1 // pred_check
      %p174 = pneg %p173
    $region35: #{tpu_custom_call.1} parent=1 // pred_check_branch
      %176 = sbr.rel (%p174) target = $region37
    $region36: #{tpu_custom_call.1} parent=1 // pred_region
      %v177 = vld [vmem:[%s103] sm:$0xff]
      %v178 = vld [vmem:[%s103 + $0x8] sm:$0xff]
      %v179 = vld [vmem:[%s103 + $0x10] sm:$0xff]
      %v180 = vld [vmem:[%s103 + $0x18] sm:$0xff]
      %v181 = vld [vmem:[%s103 + $0x20] sm:$0xff]
      %v182 = vld [vmem:[%s103 + $0x28] sm:$0xff]
      %v183 = vld [vmem:[%s103 + $0x30] sm:$0xff]
      %v184 = vld [vmem:[%s103 + $0x38] sm:$0xff]
      %v185 = vld [vmem:[%s103 + $0x40] sm:$0xff]
      %v186 = vld [vmem:[%s103 + $0x48] sm:$0xff]
      %v187 = vld [vmem:[%s103 + $0x50] sm:$0xff]
      %v188 = vld [vmem:[%s103 + $0x58] sm:$0xff]
      %v189 = vld [vmem:[%s103 + $0x60] sm:$0xff]
      %v190 = vld [vmem:[%s103 + $0x68] sm:$0xff]
      %v191 = vld [vmem:[%s103 + $0x70] sm:$0xff]
      %v192 = vld [vmem:[%s103 + $0x78] sm:$0xff]
      %v193 = vld [vmem:[%s103 + $0x80] sm:$0xff]
      %v194 = vld [vmem:[%s103 + $0x88] sm:$0xff]
      %v195 = vld [vmem:[%s103 + $0x90] sm:$0xff]
      %v196 = vld [vmem:[%s103 + $0x98] sm:$0xff]
      %v197 = vld [vmem:[%s103 + $0xa0] sm:$0xff]
      %v198 = vld [vmem:[%s103 + $0xa8] sm:$0xff]
      %v199 = vld [vmem:[%s103 + $0xb0] sm:$0xff]
      %v200 = vld [vmem:[%s103 + $0xb8] sm:$0xff]
      %v201 = vld [vmem:[%s103 + $0xc0] sm:$0xff]
      %v202 = vld [vmem:[%s103 + $0xc8] sm:$0xff]
      %v203 = vld [vmem:[%s103 + $0xd0] sm:$0xff]
      %v204 = vld [vmem:[%s103 + $0xd8] sm:$0xff]
      %v205 = vld [vmem:[%s103 + $0xe0] sm:$0xff]
      %v206 = vld [vmem:[%s103 + $0xe8] sm:$0xff]
      %v207 = vld [vmem:[%s103 + $0xf0] sm:$0xff]
      %v208 = vld [vmem:[%s103 + $0xf8] sm:$0xff]
      %v209 = vld [vmem:[%s3] sm:$0xff]
      %v210 = vld [vmem:[%s3 + $0x8] sm:$0xff]
      %v211 = vld [vmem:[%s3 + $0x10] sm:$0xff]
      %v212 = vld [vmem:[%s3 + $0x18] sm:$0xff]
      %v213 = vld [vmem:[%s3 + $0x20] sm:$0xff]
      %v214 = vld [vmem:[%s3 + $0x28] sm:$0xff]
      %v215 = vld [vmem:[%s3 + $0x30] sm:$0xff]
      %v216 = vld [vmem:[%s3 + $0x38] sm:$0xff]
      %v217 = vld [vmem:[%s3 + $0x40] sm:$0xff]
      %v218 = vld [vmem:[%s3 + $0x48] sm:$0xff]
      %v219 = vld [vmem:[%s3 + $0x50] sm:$0xff]
      %v220 = vld [vmem:[%s3 + $0x58] sm:$0xff]
      %v221 = vld [vmem:[%s3 + $0x60] sm:$0xff]
      %v222 = vld [vmem:[%s3 + $0x68] sm:$0xff]
      %v223 = vld [vmem:[%s3 + $0x70] sm:$0xff]
      %v224 = vld [vmem:[%s3 + $0x78] sm:$0xff]
      %225 = vmatprep.subr.mxu0 0.0
      %226 = vmatpush1.xpose.msra.mxu0 %v177
      %227 = vmatprep.subr.mxu0 0.0
      %228 = vmatpush1.xpose.msra.mxu0 %v179
      %229 = vmatprep.subr.mxu0 0.0
      %230 = vmatpush1.xpose.msra.mxu0 %v181
      %231 = vmatprep.subr.mxu0 0.0
      %232 = vmatpush1.xpose.msra.mxu0 %v183
      %233 = vmatprep.subr.mxu0 0.0
      %234 = vmatpush1.xpose.msra.mxu0 %v185
      %235 = vmatprep.subr.mxu0 0.0
      %236 = vmatpush1.xpose.msra.mxu0 %v187
      %237 = vmatprep.subr.mxu0 0.0
      %238 = vmatpush1.xpose.msra.mxu0 %v189
      %239 = vmatprep.subr.mxu0 0.0
      %240 = vmatpush1.xpose.msra.mxu0 %v191
      %241 = vmatprep.subr.mxu0 0.0
      %242 = vmatpush1.xpose.msra.mxu0 %v193
      %243 = vmatprep.subr.mxu0 0.0
      %244 = vmatpush1.xpose.msra.mxu0 %v195
      %245 = vmatprep.subr.mxu0 0.0
      %246 = vmatpush1.xpose.msra.mxu0 %v197
      %247 = vmatprep.subr.mxu0 0.0
      %248 = vmatpush1.xpose.msra.mxu0 %v199
      %249 = vmatprep.subr.mxu0 0.0
      %250 = vmatpush1.xpose.msra.mxu0 %v201
      %251 = vmatprep.subr.mxu0 0.0
      %252 = vmatpush1.xpose.msra.mxu0 %v203
      %253 = vmatprep.subr.mxu0 0.0
      %254 = vmatpush1.xpose.msra.mxu0 %v205
      %255 = vmatprep.subr.mxu0 0.0
      %256 = vmatpush1.xpose.msra.mxu0 %v207
      %257 = vmatprep.subr.mxu0 0.0
      %258 = vmatpush1.xpose.msra.mxu0 0.0
      %259 = vmatprep.subr.mxu0 0.0
      %260 = vmatpush1.xpose.msra.mxu0 0.0
      %261 = vmatprep.subr.mxu0 0.0
      %262 = vmatpush1.xpose.msra.mxu0 0.0
      %263 = vmatprep.subr.mxu0 0.0
      %264 = vmatpush1.xpose.msra.mxu0 0.0
      %265 = vmatprep.subr.mxu0 0.0
      %266 = vmatpush1.xpose.msra.mxu0 0.0
      %267 = vmatprep.subr.mxu0 0.0
      %268 = vmatpush1.xpose.msra.mxu0 0.0
      %269 = vmatprep.subr.mxu0 0.0
      %270 = vmatpush1.xpose.msra.mxu0 0.0
      %271 = vmatprep.subr.mxu0 0.0
      %272 = vmatpush1.xpose.msra.mxu0 0.0
      %273 = vmatprep.subr.mxu0 0.0
      %274 = vmatpush1.xpose.msra.mxu0 0.0
      %275 = vmatprep.subr.mxu0 0.0
      %276 = vmatpush1.xpose.msra.mxu0 0.0
      %277 = vmatprep.subr.mxu0 0.0
      %278 = vmatpush1.xpose.msra.mxu0 0.0
      %279 = vmatprep.subr.mxu0 0.0
      %280 = vmatpush1.xpose.msra.mxu0 0.0
      %281 = vmatprep.subr.mxu0 0.0
      %282 = vmatpush1.xpose.msra.mxu0 0.0
      %283 = vmatprep.subr.mxu0 0.0
      %284 = vmatpush1.xpose.msra.mxu0 0.0
      %285 = vmatprep.subr.mxu0 0.0
      %286 = vmatpush1.xpose.msra.mxu0 0.0
      %287 = vmatprep.subr.mxu0 0.0
      %288 = vmatpush1.xpose.msra.mxu0 0.0
      %289 = vmatprep.mubr.f32.mxu0 0.0
      %290 = vmatmul.mubr.f32.gmra.mrb[0].mxu0 %v209
      %v291 = vpop.f32.mrb[0].mxu0
      %v292 = vadd.f32 0.0, %v291
      %v293 = vpop.f32.mrb[0].mxu0
      %294 = vmatprep.mubr.f32.mxu0 0.0
      %295 = vmatmul.mubr.f32.gmra.mrb[0].mxu0 %v210
      %v296 = vpop.f32.mrb[0].mxu0
      %v297 = vadd.f32 0.0, %v296
      %v298 = vpop.f32.mrb[0].mxu0
      %299 = vmatprep.mubr.f32.mxu0 0.0
      %300 = vmatmul.mubr.f32.gmra.mrb[0].mxu0 %v211
      %v301 = vpop.f32.mrb[0].mxu0
      %v302 = vadd.f32 0.0, %v301
      %v303 = vpop.f32.mrb[0].mxu0
      %304 = vmatprep.mubr.f32.mxu0 0.0
      %305 = vmatmul.mubr.f32.gmra.mrb[0].mxu0 %v212
      %v306 = vpop.f32.mrb[0].mxu0
      %v307 = vadd.f32 0.0, %v306
      %v308 = vpop.f32.mrb[0].mxu0
      %309 = vmatprep.mubr.f32.mxu0 0.0
      %310 = vmatmul.mubr.f32.gmra.mrb[0].mxu0 %v213
      %v311 = vpop.f32.mrb[0].mxu0
      %v312 = vadd.f32 0.0, %v311
      %v313 = vpop.f32.mrb[0].mxu0
      %314 = vmatprep.mubr.f32.mxu0 0.0
      %315 = vmatmul.mubr.f32.gmra.mrb[0].mxu0 %v214
      %v316 = vpop.f32.mrb[0].mxu0
      %v317 = vadd.f32 0.0, %v316
      %v318 = vpop.f32.mrb[0].mxu0
      %319 = vmatprep.mubr.f32.mxu0 0.0
      %320 = vmatmul.mubr.f32.gmra.mrb[0].mxu0 %v215
      %v321 = vpop.f32.mrb[0].mxu0
      %v322 = vadd.f32 0.0, %v321
      %v323 = vpop.f32.mrb[0].mxu0
      %324 = vmatprep.mubr.f32.mxu0 0.0
      %325 = vmatmul.mubr.f32.gmra.mrb[0].mxu0 %v216
      %v326 = vpop.f32.mrb[0].mxu0
      %v327 = vadd.f32 0.0, %v326
      %v328 = vpop.f32.mrb[0].mxu0
      %329 = vmatprep.mubr.f32.mxu0 0.0
      %330 = vmatmul.mubr.f32.gmra.mrb[0].mxu0 %v217
      %v331 = vpop.f32.mrb[0].mxu0
      %v332 = vadd.f32 0.0, %v331
      %v333 = vpop.f32.mrb[0].mxu0
      %334 = vmatprep.mubr.f32.mxu0 0.0
      %335 = vmatmul.mubr.f32.gmra.mrb[0].mxu0 %v218
      %v336 = vpop.f32.mrb[0].mxu0
      %v337 = vadd.f32 0.0, %v336
      %v338 = vpop.f32.mrb[0].mxu0
      %339 = vmatprep.mubr.f32.mxu0 0.0
      %340 = vmatmul.mubr.f32.gmra.mrb[0].mxu0 %v219
      %v341 = vpop.f32.mrb[0].mxu0
      %v342 = vadd.f32 0.0, %v341
      %v343 = vpop.f32.mrb[0].mxu0
      %344 = vmatprep.mubr.f32.mxu0 0.0
      %345 = vmatmul.mubr.f32.gmra.mrb[0].mxu0 %v220
      %v346 = vpop.f32.mrb[0].mxu0
      %v347 = vadd.f32 0.0, %v346
      %v348 = vpop.f32.mrb[0].mxu0
      %349 = vmatprep.mubr.f32.mxu0 0.0
      %350 = vmatmul.mubr.f32.gmra.mrb[0].mxu0 %v221
      %v351 = vpop.f32.mrb[0].mxu0
      %v352 = vadd.f32 0.0, %v351
      %v353 = vpop.f32.mrb[0].mxu0
      %354 = vmatprep.mubr.f32.mxu0 0.0
      %355 = vmatmul.mubr.f32.gmra.mrb[0].mxu0 %v222
      %v356 = vpop.f32.mrb[0].mxu0
      %v357 = vadd.f32 0.0, %v356
      %v358 = vpop.f32.mrb[0].mxu0
      %359 = vmatprep.mubr.f32.mxu0 0.0
      %360 = vmatmul.mubr.f32.gmra.mrb[0].mxu0 %v223
      %v361 = vpop.f32.mrb[0].mxu0
      %v362 = vadd.f32 0.0, %v361
      %v363 = vpop.f32.mrb[0].mxu0
      %364 = vmatprep.mubr.f32.mxu0 0.0
      %365 = vmatmul.mubr.f32.gmra.mrb[0].mxu0 %v224
      %v366 = vpop.f32.mrb[0].mxu0
      %v367 = vadd.f32 0.0, %v366
      %v368 = vpop.f32.mrb[0].mxu0
      %369 = vdwg.mxu0
      %v370 = vmul.f32 %v292, 0.17677669
      %v371 = vmul.f32 %v297, 0.17677669
      %v372 = vmul.f32 %v302, 0.17677669
      %v373 = vmul.f32 %v307, 0.17677669
      %v374 = vmul.f32 %v312, 0.17677669
      %v375 = vmul.f32 %v317, 0.17677669
      %v376 = vmul.f32 %v322, 0.17677669
      %v377 = vmul.f32 %v327, 0.17677669
      %v378 = vmul.f32 %v332, 0.17677669
      %v379 = vmul.f32 %v337, 0.17677669
      %v380 = vmul.f32 %v342, 0.17677669
      %v381 = vmul.f32 %v347, 0.17677669
      %v382 = vmul.f32 %v352, 0.17677669
      %v383 = vmul.f32 %v357, 0.17677669
      %v384 = vmul.f32 %v362, 0.17677669
      %v385 = vmul.f32 %v367, 0.17677669
      %v386 = vmax.f32 %v370, -5.0
      %v387 = vmax.f32 %v371, -5.0
      %v388 = vmax.f32 %v372, -5.0
      %v389 = vmax.f32 %v373, -5.0
      %v390 = vmax.f32 %v374, -5.0
      %v391 = vmax.f32 %v375, -5.0
      %v392 = vmax.f32 %v376, -5.0
      %v393 = vmax.f32 %v377, -5.0
      %v394 = vmax.f32 %v378, -5.0
      %v395 = vmax.f32 %v379, -5.0
      %v396 = vmax.f32 %v380, -5.0
      %v397 = vmax.f32 %v381, -5.0
      %v398 = vmax.f32 %v382, -5.0
      %v399 = vmax.f32 %v383, -5.0
      %v400 = vmax.f32 %v384, -5.0
      %v401 = vmax.f32 %v385, -5.0
      %v402 = vmin.f32 %v386, 5.0
      %v403 = vmin.f32 %v387, 5.0
      %v404 = vmin.f32 %v388, 5.0
      %v405 = vmin.f32 %v389, 5.0
      %v406 = vmin.f32 %v390, 5.0
      %v407 = vmin.f32 %v391, 5.0
      %v408 = vmin.f32 %v392, 5.0
      %v409 = vmin.f32 %v393, 5.0
      %v410 = vmin.f32 %v394, 5.0
      %v411 = vmin.f32 %v395, 5.0
      %v412 = vmin.f32 %v396, 5.0
      %v413 = vmin.f32 %v397, 5.0
      %v414 = vmin.f32 %v398, 5.0
      %v415 = vmin.f32 %v399, 5.0
      %v416 = vmin.f32 %v400, 5.0
      %v417 = vmin.f32 %v401, 5.0
      %v418 = vmul.f32 %v402, 1.442695
      %v419 = vpow.pop %v418
      %v420 = vmul.f32 %v403, 1.442695
      %v421 = vpow.pop %v420
      %v422 = vmul.f32 %v404, 1.442695
      %v423 = vpow.pop %v422
      %v424 = vmul.f32 %v405, 1.442695
      %v425 = vpow.pop %v424
      %v426 = vmul.f32 %v406, 1.442695
      %v427 = vpow.pop %v426
      %v428 = vmul.f32 %v407, 1.442695
      %v429 = vpow.pop %v428
      %v430 = vmul.f32 %v408, 1.442695
      %v431 = vpow.pop %v430
      %v432 = vmul.f32 %v409, 1.442695
      %v433 = vpow.pop %v432
      %v434 = vmul.f32 %v410, 1.442695
      %v435 = vpow.pop %v434
      %v436 = vmul.f32 %v411, 1.442695
      %v437 = vpow.pop %v436
      %v438 = vmul.f32 %v412, 1.442695
      %v439 = vpow.pop %v438
      %v440 = vmul.f32 %v413, 1.442695
      %v441 = vpow.pop %v440
      %v442 = vmul.f32 %v414, 1.442695
      %v443 = vpow.pop %v442
      %v444 = vmul.f32 %v415, 1.442695
      %v445 = vpow.pop %v444
      %v446 = vmul.f32 %v416, 1.442695
      %v447 = vpow.pop %v446
      %v448 = vmul.f32 %v417, 1.442695
      %v449 = vpow.pop %v448
      %s450 = smul.u32 0, 128
      %v451 = vlaneseq
      %v452 = vand.u32 %v451, 127
      %v453 = vstv %s450
      %v454 = vadd.s32 %v453, %v452
      %v455 = vld [vmem:[%s2] sm:$0xff]
      %v456 = vld [vmem:[%s2 + $0x8] sm:$0xff]
      %v457 = vld [vmem:[%s2 + $0x10] sm:$0xff]
      %v458 = vld [vmem:[%s2 + $0x18] sm:$0xff]
      %v459 = vld [vmem:[%s2 + $0x20] sm:$0xff]
      %v460 = vld [vmem:[%s2 + $0x28] sm:$0xff]
      %v461 = vld [vmem:[%s2 + $0x30] sm:$0xff]
      %v462 = vld [vmem:[%s2 + $0x38] sm:$0xff]
      %v463 = vld [vmem:[%s2 + $0x40] sm:$0xff]
      %v464 = vld [vmem:[%s2 + $0x48] sm:$0xff]
      %v465 = vld [vmem:[%s2 + $0x50] sm:$0xff]
      %v466 = vld [vmem:[%s2 + $0x58] sm:$0xff]
      %v467 = vld [vmem:[%s2 + $0x60] sm:$0xff]
      %v468 = vld [vmem:[%s2 + $0x68] sm:$0xff]
      %v469 = vld [vmem:[%s2 + $0x70] sm:$0xff]
      %v470 = vld [vmem:[%s2 + $0x78] sm:$0xff]
      %471 = vset.pattern.permute.xlu0 0
      %472 = vperm.xlu0 %471, %v455
      %v473 = vpop.permute.xlu0 %472
      %474 = vset.pattern.permute.xlu0 0
      %475 = vperm.xlu0 %474, %v456
      %v476 = vpop.permute.xlu0 %475
      %477 = vset.pattern.permute.xlu0 0
      %478 = vperm.xlu0 %477, %v457
      %v479 = vpop.permute.xlu0 %478
      %480 = vset.pattern.permute.xlu0 0
      %481 = vperm.xlu0 %480, %v458
      %v482 = vpop.permute.xlu0 %481
      %483 = vset.pattern.permute.xlu0 0
      %484 = vperm.xlu0 %483, %v459
      %v485 = vpop.permute.xlu0 %484
      %486 = vset.pattern.permute.xlu0 0
      %487 = vperm.xlu0 %486, %v460
      %v488 = vpop.permute.xlu0 %487
      %489 = vset.pattern.permute.xlu0 0
      %490 = vperm.xlu0 %489, %v461
      %v491 = vpop.permute.xlu0 %490
      %492 = vset.pattern.permute.xlu0 0
      %493 = vperm.xlu0 %492, %v462
      %v494 = vpop.permute.xlu0 %493
      %495 = vset.pattern.permute.xlu0 0
      %496 = vperm.xlu0 %495, %v463
      %v497 = vpop.permute.xlu0 %496
      %498 = vset.pattern.permute.xlu0 0
      %499 = vperm.xlu0 %498, %v464
      %v500 = vpop.permute.xlu0 %499
      %501 = vset.pattern.permute.xlu0 0
      %502 = vperm.xlu0 %501, %v465
      %v503 = vpop.permute.xlu0 %502
      %504 = vset.pattern.permute.xlu0 0
      %505 = vperm.xlu0 %504, %v466
      %v506 = vpop.permute.xlu0 %505
      %507 = vset.pattern.permute.xlu0 0
      %508 = vperm.xlu0 %507, %v467
      %v509 = vpop.permute.xlu0 %508
      %510 = vset.pattern.permute.xlu0 0
      %511 = vperm.xlu0 %510, %v468
      %v512 = vpop.permute.xlu0 %511
      %513 = vset.pattern.permute.xlu0 0
      %514 = vperm.xlu0 %513, %v469
      %v515 = vpop.permute.xlu0 %514
      %516 = vset.pattern.permute.xlu0 0
      %517 = vperm.xlu0 %516, %v470
      %v518 = vpop.permute.xlu0 %517
      %vm519 = vcmp.eq.s32.totalorder %v454, %v473
      %vm520 = vcmp.eq.s32.totalorder %v454, %v476
      %vm521 = vcmp.eq.s32.totalorder %v454, %v479
      %vm522 = vcmp.eq.s32.totalorder %v454, %v482
      %vm523 = vcmp.eq.s32.totalorder %v454, %v485
      %vm524 = vcmp.eq.s32.totalorder %v454, %v488
      %vm525 = vcmp.eq.s32.totalorder %v454, %v491
      %vm526 = vcmp.eq.s32.totalorder %v454, %v494
      %vm527 = vcmp.eq.s32.totalorder %v454, %v497
      %vm528 = vcmp.eq.s32.totalorder %v454, %v500
      %vm529 = vcmp.eq.s32.totalorder %v454, %v503
      %vm530 = vcmp.eq.s32.totalorder %v454, %v506
      %vm531 = vcmp.eq.s32.totalorder %v454, %v509
      %vm532 = vcmp.eq.s32.totalorder %v454, %v512
      %vm533 = vcmp.eq.s32.totalorder %v454, %v515
      %vm534 = vcmp.eq.s32.totalorder %v454, %v518
      %535 = vset.pattern.permute.xlu0 1
      %536 = vperm.xlu0 %535, %v455
      %v537 = vpop.permute.xlu0 %536
      %538 = vset.pattern.permute.xlu0 1
      %539 = vperm.xlu0 %538, %v456
      %v540 = vpop.permute.xlu0 %539
      %541 = vset.pattern.permute.xlu0 1
      %542 = vperm.xlu0 %541, %v457
      %v543 = vpop.permute.xlu0 %542
      %544 = vset.pattern.permute.xlu0 1
      %545 = vperm.xlu0 %544, %v458
      %v546 = vpop.permute.xlu0 %545
      %547 = vset.pattern.permute.xlu0 1
      %548 = vperm.xlu0 %547, %v459
      %v549 = vpop.permute.xlu0 %548
      %550 = vset.pattern.permute.xlu0 1
      %551 = vperm.xlu0 %550, %v460
      %v552 = vpop.permute.xlu0 %551
      %553 = vset.pattern.permute.xlu0 1
      %554 = vperm.xlu0 %553, %v461
      %v555 = vpop.permute.xlu0 %554
      %556 = vset.pattern.permute.xlu0 1
      %557 = vperm.xlu0 %556, %v462
      %v558 = vpop.permute.xlu0 %557
      %559 = vset.pattern.permute.xlu0 1
      %560 = vperm.xlu0 %559, %v463
      %v561 = vpop.permute.xlu0 %560
      %562 = vset.pattern.permute.xlu0 1
      %563 = vperm.xlu0 %562, %v464
      %v564 = vpop.permute.xlu0 %563
      %565 = vset.pattern.permute.xlu0 1
      %566 = vperm.xlu0 %565, %v465
      %v567 = vpop.permute.xlu0 %566
      %568 = vset.pattern.permute.xlu0 1
      %569 = vperm.xlu0 %568, %v466
      %v570 = vpop.permute.xlu0 %569
      %571 = vset.pattern.permute.xlu0 1
      %572 = vperm.xlu0 %571, %v467
      %v573 = vpop.permute.xlu0 %572
      %574 = vset.pattern.permute.xlu0 1
      %575 = vperm.xlu0 %574, %v468
      %v576 = vpop.permute.xlu0 %575
      %577 = vset.pattern.permute.xlu0 1
      %578 = vperm.xlu0 %577, %v469
      %v579 = vpop.permute.xlu0 %578
      %580 = vset.pattern.permute.xlu0 1
      %581 = vperm.xlu0 %580, %v470
      %v582 = vpop.permute.xlu0 %581
      %vm583 = vcmp.eq.s32.totalorder %v454, %v537
      %vm584 = vcmp.eq.s32.totalorder %v454, %v540
      %vm585 = vcmp.eq.s32.totalorder %v454, %v543
      %vm586 = vcmp.eq.s32.totalorder %v454, %v546
      %vm587 = vcmp.eq.s32.totalorder %v454, %v549
      %vm588 = vcmp.eq.s32.totalorder %v454, %v552
      %vm589 = vcmp.eq.s32.totalorder %v454, %v555
      %vm590 = vcmp.eq.s32.totalorder %v454, %v558
      %vm591 = vcmp.eq.s32.totalorder %v454, %v561
      %vm592 = vcmp.eq.s32.totalorder %v454, %v564
      %vm593 = vcmp.eq.s32.totalorder %v454, %v567
      %vm594 = vcmp.eq.s32.totalorder %v454, %v570
      %vm595 = vcmp.eq.s32.totalorder %v454, %v573
      %vm596 = vcmp.eq.s32.totalorder %v454, %v576
      %vm597 = vcmp.eq.s32.totalorder %v454, %v579
      %vm598 = vcmp.eq.s32.totalorder %v454, %v582
      %vm599 = vmor %vm519, %vm583
      %vm600 = vmor %vm520, %vm584
      %vm601 = vmor %vm521, %vm585
      %vm602 = vmor %vm522, %vm586
      %vm603 = vmor %vm523, %vm587
      %vm604 = vmor %vm524, %vm588
      %vm605 = vmor %vm525, %vm589
      %vm606 = vmor %vm526, %vm590
      %vm607 = vmor %vm527, %vm591
      %vm608 = vmor %vm528, %vm592
      %vm609 = vmor %vm529, %vm593
      %vm610 = vmor %vm530, %vm594
      %vm611 = vmor %vm531, %vm595
      %vm612 = vmor %vm532, %vm596
      %vm613 = vmor %vm533, %vm597
      %vm614 = vmor %vm534, %vm598
      %615 = vset.pattern.permute.xlu0 2
      %616 = vperm.xlu0 %615, %v455
      %v617 = vpop.permute.xlu0 %616
      %618 = vset.pattern.permute.xlu0 2
      %619 = vperm.xlu0 %618, %v456
      %v620 = vpop.permute.xlu0 %619
      %621 = vset.pattern.permute.xlu0 2
      %622 = vperm.xlu0 %621, %v457
      %v623 = vpop.permute.xlu0 %622
      %624 = vset.pattern.permute.xlu0 2
      %625 = vperm.xlu0 %624, %v458
      %v626 = vpop.permute.xlu0 %625
      %627 = vset.pattern.permute.xlu0 2
      %628 = vperm.xlu0 %627, %v459
      %v629 = vpop.permute.xlu0 %628
      %630 = vset.pattern.permute.xlu0 2
      %631 = vperm.xlu0 %630, %v460
      %v632 = vpop.permute.xlu0 %631
      %633 = vset.pattern.permute.xlu0 2
      %634 = vperm.xlu0 %633, %v461
      %v635 = vpop.permute.xlu0 %634
      %636 = vset.pattern.permute.xlu0 2
      %637 = vperm.xlu0 %636, %v462
      %v638 = vpop.permute.xlu0 %637
      %639 = vset.pattern.permute.xlu0 2
      %640 = vperm.xlu0 %639, %v463
      %v641 = vpop.permute.xlu0 %640
      %642 = vset.pattern.permute.xlu0 2
      %643 = vperm.xlu0 %642, %v464
      %v644 = vpop.permute.xlu0 %643
      %645 = vset.pattern.permute.xlu0 2
      %646 = vperm.xlu0 %645, %v465
      %v647 = vpop.permute.xlu0 %646
      %648 = vset.pattern.permute.xlu0 2
      %649 = vperm.xlu0 %648, %v466
      %v650 = vpop.permute.xlu0 %649
      %651 = vset.pattern.permute.xlu0 2
      %652 = vperm.xlu0 %651, %v467
      %v653 = vpop.permute.xlu0 %652
      %654 = vset.pattern.permute.xlu0 2
      %655 = vperm.xlu0 %654, %v468
      %v656 = vpop.permute.xlu0 %655
      %657 = vset.pattern.permute.xlu0 2
      %658 = vperm.xlu0 %657, %v469
      %v659 = vpop.permute.xlu0 %658
      %660 = vset.pattern.permute.xlu0 2
      %661 = vperm.xlu0 %660, %v470
      %v662 = vpop.permute.xlu0 %661
      %vm663 = vcmp.eq.s32.totalorder %v454, %v617
      %vm664 = vcmp.eq.s32.totalorder %v454, %v620
      %vm665 = vcmp.eq.s32.totalorder %v454, %v623
      %vm666 = vcmp.eq.s32.totalorder %v454, %v626
      %vm667 = vcmp.eq.s32.totalorder %v454, %v629
      %vm668 = vcmp.eq.s32.totalorder %v454, %v632
      %vm669 = vcmp.eq.s32.totalorder %v454, %v635
      %vm670 = vcmp.eq.s32.totalorder %v454, %v638
      %vm671 = vcmp.eq.s32.totalorder %v454, %v641
      %vm672 = vcmp.eq.s32.totalorder %v454, %v644
      %vm673 = vcmp.eq.s32.totalorder %v454, %v647
      %vm674 = vcmp.eq.s32.totalorder %v454, %v650
      %vm675 = vcmp.eq.s32.totalorder %v454, %v653
      %vm676 = vcmp.eq.s32.totalorder %v454, %v656
      %vm677 = vcmp.eq.s32.totalorder %v454, %v659
      %vm678 = vcmp.eq.s32.totalorder %v454, %v662
      %vm679 = vmor %vm599, %vm663
      %vm680 = vmor %vm600, %vm664
      %vm681 = vmor %vm601, %vm665
      %vm682 = vmor %vm602, %vm666
      %vm683 = vmor %vm603, %vm667
      %vm684 = vmor %vm604, %vm668
      %vm685 = vmor %vm605, %vm669
      %vm686 = vmor %vm606, %vm670
      %vm687 = vmor %vm607, %vm671
      %vm688 = vmor %vm608, %vm672
      %vm689 = vmor %vm609, %vm673
      %vm690 = vmor %vm610, %vm674
      %vm691 = vmor %vm611, %vm675
      %vm692 = vmor %vm612, %vm676
      %vm693 = vmor %vm613, %vm677
      %vm694 = vmor %vm614, %vm678
      %695 = vset.pattern.permute.xlu0 3
      %696 = vperm.xlu0 %695, %v455
      %v697 = vpop.permute.xlu0 %696
      %698 = vset.pattern.permute.xlu0 3
      %699 = vperm.xlu0 %698, %v456
      %v700 = vpop.permute.xlu0 %699
      %701 = vset.pattern.permute.xlu0 3
      %702 = vperm.xlu0 %701, %v457
      %v703 = vpop.permute.xlu0 %702
      %704 = vset.pattern.permute.xlu0 3
      %705 = vperm.xlu0 %704, %v458
      %v706 = vpop.permute.xlu0 %705
      %707 = vset.pattern.permute.xlu0 3
      %708 = vperm.xlu0 %707, %v459
      %v709 = vpop.permute.xlu0 %708
      %710 = vset.pattern.permute.xlu0 3
      %711 = vperm.xlu0 %710, %v460
      %v712 = vpop.permute.xlu0 %711
      %713 = vset.pattern.permute.xlu0 3
      %714 = vperm.xlu0 %713, %v461
      %v715 = vpop.permute.xlu0 %714
      %716 = vset.pattern.permute.xlu0 3
      %717 = vperm.xlu0 %716, %v462
      %v718 = vpop.permute.xlu0 %717
      %719 = vset.pattern.permute.xlu0 3
      %720 = vperm.xlu0 %719, %v463
      %v721 = vpop.permute.xlu0 %720
      %722 = vset.pattern.permute.xlu0 3
      %723 = vperm.xlu0 %722, %v464
      %v724 = vpop.permute.xlu0 %723
      %725 = vset.pattern.permute.xlu0 3
      %726 = vperm.xlu0 %725, %v465
      %v727 = vpop.permute.xlu0 %726
      %728 = vset.pattern.permute.xlu0 3
      %729 = vperm.xlu0 %728, %v466
      %v730 = vpop.permute.xlu0 %729
      %731 = vset.pattern.permute.xlu0 3
      %732 = vperm.xlu0 %731, %v467
      %v733 = vpop.permute.xlu0 %732
      %734 = vset.pattern.permute.xlu0 3
      %735 = vperm.xlu0 %734, %v468
      %v736 = vpop.permute.xlu0 %735
      %737 = vset.pattern.permute.xlu0 3
      %738 = vperm.xlu0 %737, %v469
      %v739 = vpop.permute.xlu0 %738
      %740 = vset.pattern.permute.xlu0 3
      %741 = vperm.xlu0 %740, %v470
      %v742 = vpop.permute.xlu0 %741
      %vm743 = vcmp.eq.s32.totalorder %v454, %v697
      %vm744 = vcmp.eq.s32.totalorder %v454, %v700
      %vm745 = vcmp.eq.s32.totalorder %v454, %v703
      %vm746 = vcmp.eq.s32.totalorder %v454, %v706
      %vm747 = vcmp.eq.s32.totalorder %v454, %v709
      %vm748 = vcmp.eq.s32.totalorder %v454, %v712
      %vm749 = vcmp.eq.s32.totalorder %v454, %v715
      %vm750 = vcmp.eq.s32.totalorder %v454, %v718
      %vm751 = vcmp.eq.s32.totalorder %v454, %v721
      %vm752 = vcmp.eq.s32.totalorder %v454, %v724
      %vm753 = vcmp.eq.s32.totalorder %v454, %v727
      %vm754 = vcmp.eq.s32.totalorder %v454, %v730
      %vm755 = vcmp.eq.s32.totalorder %v454, %v733
      %vm756 = vcmp.eq.s32.totalorder %v454, %v736
      %vm757 = vcmp.eq.s32.totalorder %v454, %v739
      %vm758 = vcmp.eq.s32.totalorder %v454, %v742
      %vm759 = vmor %vm679, %vm743
      %vm760 = vmor %vm680, %vm744
      %vm761 = vmor %vm681, %vm745
      %vm762 = vmor %vm682, %vm746
      %vm763 = vmor %vm683, %vm747
      %vm764 = vmor %vm684, %vm748
      %vm765 = vmor %vm685, %vm749
      %vm766 = vmor %vm686, %vm750
      %vm767 = vmor %vm687, %vm751
      %vm768 = vmor %vm688, %vm752
      %vm769 = vmor %vm689, %vm753
      %vm770 = vmor %vm690, %vm754
      %vm771 = vmor %vm691, %vm755
      %vm772 = vmor %vm692, %vm756
      %vm773 = vmor %vm693, %vm757
      %vm774 = vmor %vm694, %vm758
      %775 = vset.pattern.permute.xlu0 4
      %776 = vperm.xlu0 %775, %v455
      %v777 = vpop.permute.xlu0 %776
      %778 = vset.pattern.permute.xlu0 4
      %779 = vperm.xlu0 %778, %v456
      %v780 = vpop.permute.xlu0 %779
      %781 = vset.pattern.permute.xlu0 4
      %782 = vperm.xlu0 %781, %v457
      %v783 = vpop.permute.xlu0 %782
      %784 = vset.pattern.permute.xlu0 4
      %785 = vperm.xlu0 %784, %v458
      %v786 = vpop.permute.xlu0 %785
      %787 = vset.pattern.permute.xlu0 4
      %788 = vperm.xlu0 %787, %v459
      %v789 = vpop.permute.xlu0 %788
      %790 = vset.pattern.permute.xlu0 4
      %791 = vperm.xlu0 %790, %v460
      %v792 = vpop.permute.xlu0 %791
      %793 = vset.pattern.permute.xlu0 4
      %794 = vperm.xlu0 %793, %v461
      %v795 = vpop.permute.xlu0 %794
      %796 = vset.pattern.permute.xlu0 4
      %797 = vperm.xlu0 %796, %v462
      %v798 = vpop.permute.xlu0 %797
      %799 = vset.pattern.permute.xlu0 4
      %800 = vperm.xlu0 %799, %v463
      %v801 = vpop.permute.xlu0 %800
      %802 = vset.pattern.permute.xlu0 4
      %803 = vperm.xlu0 %802, %v464
      %v804 = vpop.permute.xlu0 %803
      %805 = vset.pattern.permute.xlu0 4
      %806 = vperm.xlu0 %805, %v465
      %v807 = vpop.permute.xlu0 %806
      %808 = vset.pattern.permute.xlu0 4
      %809 = vperm.xlu0 %808, %v466
      %v810 = vpop.permute.xlu0 %809
      %811 = vset.pattern.permute.xlu0 4
      %812 = vperm.xlu0 %811, %v467
      %v813 = vpop.permute.xlu0 %812
      %814 = vset.pattern.permute.xlu0 4
      %815 = vperm.xlu0 %814, %v468
      %v816 = vpop.permute.xlu0 %815
      %817 = vset.pattern.permute.xlu0 4
      %818 = vperm.xlu0 %817, %v469
      %v819 = vpop.permute.xlu0 %818
      %820 = vset.pattern.permute.xlu0 4
      %821 = vperm.xlu0 %820, %v470
      %v822 = vpop.permute.xlu0 %821
      %vm823 = vcmp.eq.s32.totalorder %v454, %v777
      %vm824 = vcmp.eq.s32.totalorder %v454, %v780
      %vm825 = vcmp.eq.s32.totalorder %v454, %v783
      %vm826 = vcmp.eq.s32.totalorder %v454, %v786
      %vm827 = vcmp.eq.s32.totalorder %v454, %v789
      %vm828 = vcmp.eq.s32.totalorder %v454, %v792
      %vm829 = vcmp.eq.s32.totalorder %v454, %v795
      %vm830 = vcmp.eq.s32.totalorder %v454, %v798
      %vm831 = vcmp.eq.s32.totalorder %v454, %v801
      %vm832 = vcmp.eq.s32.totalorder %v454, %v804
      %vm833 = vcmp.eq.s32.totalorder %v454, %v807
      %vm834 = vcmp.eq.s32.totalorder %v454, %v810
      %vm835 = vcmp.eq.s32.totalorder %v454, %v813
      %vm836 = vcmp.eq.s32.totalorder %v454, %v816
      %vm837 = vcmp.eq.s32.totalorder %v454, %v819
      %vm838 = vcmp.eq.s32.totalorder %v454, %v822
      %vm839 = vmor %vm759, %vm823
      %vm840 = vmor %vm760, %vm824
      %vm841 = vmor %vm761, %vm825
      %vm842 = vmor %vm762, %vm826
      %vm843 = vmor %vm763, %vm827
      %vm844 = vmor %vm764, %vm828
      %vm845 = vmor %vm765, %vm829
      %vm846 = vmor %vm766, %vm830
      %vm847 = vmor %vm767, %vm831
      %vm848 = vmor %vm768, %vm832
      %vm849 = vmor %vm769, %vm833
      %vm850 = vmor %vm770, %vm834
      %vm851 = vmor %vm771, %vm835
      %vm852 = vmor %vm772, %vm836
      %vm853 = vmor %vm773, %vm837
      %vm854 = vmor %vm774, %vm838
      %855 = vset.pattern.permute.xlu0 5
      %856 = vperm.xlu0 %855, %v455
      %v857 = vpop.permute.xlu0 %856
      %858 = vset.pattern.permute.xlu0 5
      %859 = vperm.xlu0 %858, %v456
      %v860 = vpop.permute.xlu0 %859
      %861 = vset.pattern.permute.xlu0 5
      %862 = vperm.xlu0 %861, %v457
      %v863 = vpop.permute.xlu0 %862
      %864 = vset.pattern.permute.xlu0 5
      %865 = vperm.xlu0 %864, %v458
      %v866 = vpop.permute.xlu0 %865
      %867 = vset.pattern.permute.xlu0 5
      %868 = vperm.xlu0 %867, %v459
      %v869 = vpop.permute.xlu0 %868
      %870 = vset.pattern.permute.xlu0 5
      %871 = vperm.xlu0 %870, %v460
      %v872 = vpop.permute.xlu0 %871
      %873 = vset.pattern.permute.xlu0 5
      %874 = vperm.xlu0 %873, %v461
      %v875 = vpop.permute.xlu0 %874
      %876 = vset.pattern.permute.xlu0 5
      %877 = vperm.xlu0 %876, %v462
      %v878 = vpop.permute.xlu0 %877
      %879 = vset.pattern.permute.xlu0 5
      %880 = vperm.xlu0 %879, %v463
      %v881 = vpop.permute.xlu0 %880
      %882 = vset.pattern.permute.xlu0 5
      %883 = vperm.xlu0 %882, %v464
      %v884 = vpop.permute.xlu0 %883
      %885 = vset.pattern.permute.xlu0 5
      %886 = vperm.xlu0 %885, %v465
      %v887 = vpop.permute.xlu0 %886
      %888 = vset.pattern.permute.xlu0 5
      %889 = vperm.xlu0 %888, %v466
      %v890 = vpop.permute.xlu0 %889
      %891 = vset.pattern.permute.xlu0 5
      %892 = vperm.xlu0 %891, %v467
      %v893 = vpop.permute.xlu0 %892
      %894 = vset.pattern.permute.xlu0 5
      %895 = vperm.xlu0 %894, %v468
      %v896 = vpop.permute.xlu0 %895
      %897 = vset.pattern.permute.xlu0 5
      %898 = vperm.xlu0 %897, %v469
      %v899 = vpop.permute.xlu0 %898
      %900 = vset.pattern.permute.xlu0 5
      %901 = vperm.xlu0 %900, %v470
      %v902 = vpop.permute.xlu0 %901
      %vm903 = vcmp.eq.s32.totalorder %v454, %v857
      %vm904 = vcmp.eq.s32.totalorder %v454, %v860
      %vm905 = vcmp.eq.s32.totalorder %v454, %v863
      %vm906 = vcmp.eq.s32.totalorder %v454, %v866
      %vm907 = vcmp.eq.s32.totalorder %v454, %v869
      %vm908 = vcmp.eq.s32.totalorder %v454, %v872
      %vm909 = vcmp.eq.s32.totalorder %v454, %v875
      %vm910 = vcmp.eq.s32.totalorder %v454, %v878
      %vm911 = vcmp.eq.s32.totalorder %v454, %v881
      %vm912 = vcmp.eq.s32.totalorder %v454, %v884
      %vm913 = vcmp.eq.s32.totalorder %v454, %v887
      %vm914 = vcmp.eq.s32.totalorder %v454, %v890
      %vm915 = vcmp.eq.s32.totalorder %v454, %v893
      %vm916 = vcmp.eq.s32.totalorder %v454, %v896
      %vm917 = vcmp.eq.s32.totalorder %v454, %v899
      %vm918 = vcmp.eq.s32.totalorder %v454, %v902
      %vm919 = vmor %vm839, %vm903
      %vm920 = vmor %vm840, %vm904
      %vm921 = vmor %vm841, %vm905
      %vm922 = vmor %vm842, %vm906
      %vm923 = vmor %vm843, %vm907
      %vm924 = vmor %vm844, %vm908
      %vm925 = vmor %vm845, %vm909
      %vm926 = vmor %vm846, %vm910
      %vm927 = vmor %vm847, %vm911
      %vm928 = vmor %vm848, %vm912
      %vm929 = vmor %vm849, %vm913
      %vm930 = vmor %vm850, %vm914
      %vm931 = vmor %vm851, %vm915
      %vm932 = vmor %vm852, %vm916
      %vm933 = vmor %vm853, %vm917
      %vm934 = vmor %vm854, %vm918
      %935 = vset.pattern.permute.xlu0 6
      %936 = vperm.xlu0 %935, %v455
      %v937 = vpop.permute.xlu0 %936
      %938 = vset.pattern.permute.xlu0 6
      %939 = vperm.xlu0 %938, %v456
      %v940 = vpop.permute.xlu0 %939
      %941 = vset.pattern.permute.xlu0 6
      %942 = vperm.xlu0 %941, %v457
      %v943 = vpop.permute.xlu0 %942
      %944 = vset.pattern.permute.xlu0 6
      %945 = vperm.xlu0 %944, %v458
      %v946 = vpop.permute.xlu0 %945
      %947 = vset.pattern.permute.xlu0 6
      %948 = vperm.xlu0 %947, %v459
      %v949 = vpop.permute.xlu0 %948
      %950 = vset.pattern.permute.xlu0 6
      %951 = vperm.xlu0 %950, %v460
      %v952 = vpop.permute.xlu0 %951
      %953 = vset.pattern.permute.xlu0 6
      %954 = vperm.xlu0 %953, %v461
      %v955 = vpop.permute.xlu0 %954
      %956 = vset.pattern.permute.xlu0 6
      %957 = vperm.xlu0 %956, %v462
      %v958 = vpop.permute.xlu0 %957
      %959 = vset.pattern.permute.xlu0 6
      %960 = vperm.xlu0 %959, %v463
      %v961 = vpop.permute.xlu0 %960
      %962 = vset.pattern.permute.xlu0 6
      %963 = vperm.xlu0 %962, %v464
      %v964 = vpop.permute.xlu0 %963
      %965 = vset.pattern.permute.xlu0 6
      %966 = vperm.xlu0 %965, %v465
      %v967 = vpop.permute.xlu0 %966
      %968 = vset.pattern.permute.xlu0 6
      %969 = vperm.xlu0 %968, %v466
      %v970 = vpop.permute.xlu0 %969
      %971 = vset.pattern.permute.xlu0 6
      %972 = vperm.xlu0 %971, %v467
      %v973 = vpop.permute.xlu0 %972
      %974 = vset.pattern.permute.xlu0 6
      %975 = vperm.xlu0 %974, %v468
      %v976 = vpop.permute.xlu0 %975
      %977 = vset.pattern.permute.xlu0 6
      %978 = vperm.xlu0 %977, %v469
      %v979 = vpop.permute.xlu0 %978
      %980 = vset.pattern.permute.xlu0 6
      %981 = vperm.xlu0 %980, %v470
      %v982 = vpop.permute.xlu0 %981
      %vm983 = vcmp.eq.s32.totalorder %v454, %v937
      %vm984 = vcmp.eq.s32.totalorder %v454, %v940
      %vm985 = vcmp.eq.s32.totalorder %v454, %v943
      %vm986 = vcmp.eq.s32.totalorder %v454, %v946
      %vm987 = vcmp.eq.s32.totalorder %v454, %v949
      %vm988 = vcmp.eq.s32.totalorder %v454, %v952
      %vm989 = vcmp.eq.s32.totalorder %v454, %v955
      %vm990 = vcmp.eq.s32.totalorder %v454, %v958
      %vm991 = vcmp.eq.s32.totalorder %v454, %v961
      %vm992 = vcmp.eq.s32.totalorder %v454, %v964
      %vm993 = vcmp.eq.s32.totalorder %v454, %v967
      %vm994 = vcmp.eq.s32.totalorder %v454, %v970
      %vm995 = vcmp.eq.s32.totalorder %v454, %v973
      %vm996 = vcmp.eq.s32.totalorder %v454, %v976
      %vm997 = vcmp.eq.s32.totalorder %v454, %v979
      %vm998 = vcmp.eq.s32.totalorder %v454, %v982
      %vm999 = vmor %vm919, %vm983
      %vm1000 = vmor %vm920, %vm984
      %vm1001 = vmor %vm921, %vm985
      %vm1002 = vmor %vm922, %vm986
      %vm1003 = vmor %vm923, %vm987
      %vm1004 = vmor %vm924, %vm988
      %vm1005 = vmor %vm925, %vm989
      %vm1006 = vmor %vm926, %vm990
      %vm1007 = vmor %vm927, %vm991
      %vm1008 = vmor %vm928, %vm992
      %vm1009 = vmor %vm929, %vm993
      %vm1010 = vmor %vm930, %vm994
      %vm1011 = vmor %vm931, %vm995
      %vm1012 = vmor %vm932, %vm996
      %vm1013 = vmor %vm933, %vm997
      %vm1014 = vmor %vm934, %vm998
      %1015 = vset.pattern.permute.xlu0 7
      %1016 = vperm.xlu0 %1015, %v455
      %v1017 = vpop.permute.xlu0 %1016
      %1018 = vset.pattern.permute.xlu0 7
      %1019 = vperm.xlu0 %1018, %v456
      %v1020 = vpop.permute.xlu0 %1019
      %1021 = vset.pattern.permute.xlu0 7
      %1022 = vperm.xlu0 %1021, %v457
      %v1023 = vpop.permute.xlu0 %1022
      %1024 = vset.pattern.permute.xlu0 7
      %1025 = vperm.xlu0 %1024, %v458
      %v1026 = vpop.permute.xlu0 %1025
      %1027 = vset.pattern.permute.xlu0 7
      %1028 = vperm.xlu0 %1027, %v459
      %v1029 = vpop.permute.xlu0 %1028
      %1030 = vset.pattern.permute.xlu0 7
      %1031 = vperm.xlu0 %1030, %v460
      %v1032 = vpop.permute.xlu0 %1031
      %1033 = vset.pattern.permute.xlu0 7
      %1034 = vperm.xlu0 %1033, %v461
      %v1035 = vpop.permute.xlu0 %1034
      %1036 = vset.pattern.permute.xlu0 7
      %1037 = vperm.xlu0 %1036, %v462
      %v1038 = vpop.permute.xlu0 %1037
      %1039 = vset.pattern.permute.xlu0 7
      %1040 = vperm.xlu0 %1039, %v463
      %v1041 = vpop.permute.xlu0 %1040
      %1042 = vset.pattern.permute.xlu0 7
      %1043 = vperm.xlu0 %1042, %v464
      %v1044 = vpop.permute.xlu0 %1043
      %1045 = vset.pattern.permute.xlu0 7
      %1046 = vperm.xlu0 %1045, %v465
      %v1047 = vpop.permute.xlu0 %1046
      %1048 = vset.pattern.permute.xlu0 7
      %1049 = vperm.xlu0 %1048, %v466
      %v1050 = vpop.permute.xlu0 %1049
      %1051 = vset.pattern.permute.xlu0 7
      %1052 = vperm.xlu0 %1051, %v467
      %v1053 = vpop.permute.xlu0 %1052
      %1054 = vset.pattern.permute.xlu0 7
      %1055 = vperm.xlu0 %1054, %v468
      %v1056 = vpop.permute.xlu0 %1055
      %1057 = vset.pattern.permute.xlu0 7
      %1058 = vperm.xlu0 %1057, %v469
      %v1059 = vpop.permute.xlu0 %1058
      %1060 = vset.pattern.permute.xlu0 7
      %1061 = vperm.xlu0 %1060, %v470
      %v1062 = vpop.permute.xlu0 %1061
      %vm1063 = vcmp.eq.s32.totalorder %v454, %v1017
      %vm1064 = vcmp.eq.s32.totalorder %v454, %v1020
      %vm1065 = vcmp.eq.s32.totalorder %v454, %v1023
      %vm1066 = vcmp.eq.s32.totalorder %v454, %v1026
      %vm1067 = vcmp.eq.s32.totalorder %v454, %v1029
      %vm1068 = vcmp.eq.s32.totalorder %v454, %v1032
      %vm1069 = vcmp.eq.s32.totalorder %v454, %v1035
      %vm1070 = vcmp.eq.s32.totalorder %v454, %v1038
      %vm1071 = vcmp.eq.s32.totalorder %v454, %v1041
      %vm1072 = vcmp.eq.s32.totalorder %v454, %v1044
      %vm1073 = vcmp.eq.s32.totalorder %v454, %v1047
      %vm1074 = vcmp.eq.s32.totalorder %v454, %v1050
      %vm1075 = vcmp.eq.s32.totalorder %v454, %v1053
      %vm1076 = vcmp.eq.s32.totalorder %v454, %v1056
      %vm1077 = vcmp.eq.s32.totalorder %v454, %v1059
      %vm1078 = vcmp.eq.s32.totalorder %v454, %v1062
      %vm1079 = vmor %vm999, %vm1063
      %vm1080 = vmor %vm1000, %vm1064
      %vm1081 = vmor %vm1001, %vm1065
      %vm1082 = vmor %vm1002, %vm1066
      %vm1083 = vmor %vm1003, %vm1067
      %vm1084 = vmor %vm1004, %vm1068
      %vm1085 = vmor %vm1005, %vm1069
      %vm1086 = vmor %vm1006, %vm1070
      %vm1087 = vmor %vm1007, %vm1071
      %vm1088 = vmor %vm1008, %vm1072
      %vm1089 = vmor %vm1009, %vm1073
      %vm1090 = vmor %vm1010, %vm1074
      %vm1091 = vmor %vm1011, %vm1075
      %vm1092 = vmor %vm1012, %vm1076
      %vm1093 = vmor %vm1013, %vm1077
      %vm1094 = vmor %vm1014, %vm1078
      %v1095 = vsel %vm1079, %v419, 0.0
      %v1096 = vsel %vm1080, %v421, 0.0
      %v1097 = vsel %vm1081, %v423, 0.0
      %v1098 = vsel %vm1082, %v425, 0.0
      %v1099 = vsel %vm1083, %v427, 0.0
      %v1100 = vsel %vm1084, %v429, 0.0
      %v1101 = vsel %vm1085, %v431, 0.0
      %v1102 = vsel %vm1086, %v433, 0.0
      %v1103 = vsel %vm1087, %v435, 0.0
      %v1104 = vsel %vm1088, %v437, 0.0
      %v1105 = vsel %vm1089, %v439, 0.0
      %v1106 = vsel %vm1090, %v441, 0.0
      %v1107 = vsel %vm1091, %v443, 0.0
      %v1108 = vsel %vm1092, %v445, 0.0
      %v1109 = vsel %vm1093, %v447, 0.0
      %v1110 = vsel %vm1094, %v449, 0.0
      %v1111 = vld [vmem:[%s5] sm:$0xff]
      %v1112 = vld [vmem:[%s5 + $0x8] sm:$0xff]
      %v1113 = vld [vmem:[%s5 + $0x10] sm:$0xff]
      %v1114 = vld [vmem:[%s5 + $0x18] sm:$0xff]
      %v1115 = vld [vmem:[%s5 + $0x20] sm:$0xff]
      %v1116 = vld [vmem:[%s5 + $0x28] sm:$0xff]
      %v1117 = vld [vmem:[%s5 + $0x30] sm:$0xff]
      %v1118 = vld [vmem:[%s5 + $0x38] sm:$0xff]
      %v1119 = vld [vmem:[%s5 + $0x40] sm:$0xff]
      %v1120 = vld [vmem:[%s5 + $0x48] sm:$0xff]
      %v1121 = vld [vmem:[%s5 + $0x50] sm:$0xff]
      %v1122 = vld [vmem:[%s5 + $0x58] sm:$0xff]
      %v1123 = vld [vmem:[%s5 + $0x60] sm:$0xff]
      %v1124 = vld [vmem:[%s5 + $0x68] sm:$0xff]
      %v1125 = vld [vmem:[%s5 + $0x70] sm:$0xff]
      %v1126 = vld [vmem:[%s5 + $0x78] sm:$0xff]
      %v1127 = vld [vmem:[%s116] sm:$0xff]
      %vm1128 = vcmask 64512
      %v1130 = vsel %vm1128, %v1111, 0
      %v1133 = vsel %vm1128, %v1112, 0
      %v1136 = vsel %vm1128, %v1113, 0
      %v1139 = vsel %vm1128, %v1114, 0
      %v1142 = vsel %vm1128, %v1115, 0
      %v1145 = vsel %vm1128, %v1116, 0
      %v1148 = vsel %vm1128, %v1117, 0
      %v1151 = vsel %vm1128, %v1118, 0
      %v1154 = vsel %vm1128, %v1119, 0
      %v1157 = vsel %vm1128, %v1120, 0
      %v1160 = vsel %vm1128, %v1121, 0
      %v1163 = vsel %vm1128, %v1122, 0
      %v1166 = vsel %vm1128, %v1123, 0
      %v1169 = vsel %vm1128, %v1124, 0
      %v1172 = vsel %vm1128, %v1125, 0
      %v1175 = vsel %vm1128, %v1126, 0
      %1177 = vmatprep.subr.mxu0 0.0
      %1178 = vmatpush1.msra.mxu0 %v1127
      %1179 = vmatprep.subr.mxu0 0.0
      %1180 = vmatpush1.msra.mxu0 0.0
      %1181 = vmatprep.subr.mxu0 0.0
      %1182 = vmatpush1.msra.mxu0 0.0
      %1183 = vmatprep.subr.mxu0 0.0
      %1184 = vmatpush1.msra.mxu0 0.0
      %1185 = vmatprep.subr.mxu0 0.0
      %1186 = vmatpush1.msra.mxu0 0.0
      %1187 = vmatprep.subr.mxu0 0.0
      %1188 = vmatpush1.msra.mxu0 0.0
      %1189 = vmatprep.subr.mxu0 0.0
      %1190 = vmatpush1.msra.mxu0 0.0
      %1191 = vmatprep.subr.mxu0 0.0
      %1192 = vmatpush1.msra.mxu0 0.0
      %1193 = vmatprep.subr.mxu0 0.0
      %1194 = vmatpush1.msra.mxu0 0.0
      %1195 = vmatprep.subr.mxu0 0.0
      %1196 = vmatpush1.msra.mxu0 0.0
      %1197 = vmatprep.subr.mxu0 0.0
      %1198 = vmatpush1.msra.mxu0 0.0
      %1199 = vmatprep.subr.mxu0 0.0
      %1200 = vmatpush1.msra.mxu0 0.0
      %1201 = vmatprep.subr.mxu0 0.0
      %1202 = vmatpush1.msra.mxu0 0.0
      %1203 = vmatprep.subr.mxu0 0.0
      %1204 = vmatpush1.msra.mxu0 0.0
      %1205 = vmatprep.subr.mxu0 0.0
      %1206 = vmatpush1.msra.mxu0 0.0
      %1207 = vmatprep.subr.mxu0 0.0
      %1208 = vmatpush1.msra.mxu0 0.0
      %1209 = vmatprep.subr.mxu0 0.0
      %1210 = vmatpush1.msra.mxu0 0.0
      %1211 = vmatprep.subr.mxu0 0.0
      %1212 = vmatpush1.msra.mxu0 0.0
      %1213 = vmatprep.subr.mxu0 0.0
      %1214 = vmatpush1.msra.mxu0 0.0
      %1215 = vmatprep.subr.mxu0 0.0
      %1216 = vmatpush1.msra.mxu0 0.0
      %1217 = vmatprep.subr.mxu0 0.0
      %1218 = vmatpush1.msra.mxu0 0.0
      %1219 = vmatprep.subr.mxu0 0.0
      %1220 = vmatpush1.msra.mxu0 0.0
      %1221 = vmatprep.subr.mxu0 0.0
      %1222 = vmatpush1.msra.mxu0 0.0
      %1223 = vmatprep.subr.mxu0 0.0
      %1224 = vmatpush1.msra.mxu0 0.0
      %1225 = vmatprep.subr.mxu0 0.0
      %1226 = vmatpush1.msra.mxu0 0.0
      %1227 = vmatprep.subr.mxu0 0.0
      %1228 = vmatpush1.msra.mxu0 0.0
      %1229 = vmatprep.subr.mxu0 0.0
      %1230 = vmatpush1.msra.mxu0 0.0
      %1231 = vmatprep.subr.mxu0 0.0
      %1232 = vmatpush1.msra.mxu0 0.0
      %1233 = vmatprep.subr.mxu0 0.0
      %1234 = vmatpush1.msra.mxu0 0.0
      %1235 = vmatprep.subr.mxu0 0.0
      %1236 = vmatpush1.msra.mxu0 0.0
      %1237 = vmatprep.subr.mxu0 0.0
      %1238 = vmatpush1.msra.mxu0 0.0
      %1239 = vmatprep.subr.mxu0 0.0
      %1240 = vmatpush1.msra.mxu0 0.0
      %1241 = vmatprep.mubr.f32.mxu0 0.0
      %1242 = vmatmul.mubr.f32.gmra.mrb[0].mxu0 %v1130
      %v1243 = vpop.f32.mrb[0].mxu0
      %v1244 = vadd.f32 0.0, %v1243
      %v1245 = vpop.f32.mrb[0].mxu0
      %1246 = vmatprep.mubr.f32.mxu0 0.0
      %1247 = vmatmul.mubr.f32.gmra.mrb[0].mxu0 %v1133
      %v1248 = vpop.f32.mrb[0].mxu0
      %v1249 = vadd.f32 0.0, %v1248
      %v1250 = vpop.f32.mrb[0].mxu0
      %1251 = vmatprep.mubr.f32.mxu0 0.0
      %1252 = vmatmul.mubr.f32.gmra.mrb[0].mxu0 %v1136
      %v1253 = vpop.f32.mrb[0].mxu0
      %v1254 = vadd.f32 0.0, %v1253
      %v1255 = vpop.f32.mrb[0].mxu0
      %1256 = vmatprep.mubr.f32.mxu0 0.0
      %1257 = vmatmul.mubr.f32.gmra.mrb[0].mxu0 %v1139
      %v1258 = vpop.f32.mrb[0].mxu0
      %v1259 = vadd.f32 0.0, %v1258
      %v1260 = vpop.f32.mrb[0].mxu0
      %1261 = vmatprep.mubr.f32.mxu0 0.0
      %1262 = vmatmul.mubr.f32.gmra.mrb[0].mxu0 %v1142
      %v1263 = vpop.f32.mrb[0].mxu0
      %v1264 = vadd.f32 0.0, %v1263
      %v1265 = vpop.f32.mrb[0].mxu0
      %1266 = vmatprep.mubr.f32.mxu0 0.0
      %1267 = vmatmul.mubr.f32.gmra.mrb[0].mxu0 %v1145
      %v1268 = vpop.f32.mrb[0].mxu0
      %v1269 = vadd.f32 0.0, %v1268
      %v1270 = vpop.f32.mrb[0].mxu0
      %1271 = vmatprep.mubr.f32.mxu0 0.0
      %1272 = vmatmul.mubr.f32.gmra.mrb[0].mxu0 %v1148
      %v1273 = vpop.f32.mrb[0].mxu0
      %v1274 = vadd.f32 0.0, %v1273
      %v1275 = vpop.f32.mrb[0].mxu0
      %1276 = vmatprep.mubr.f32.mxu0 0.0
      %1277 = vmatmul.mubr.f32.gmra.mrb[0].mxu0 %v1151
      %v1278 = vpop.f32.mrb[0].mxu0
      %v1279 = vadd.f32 0.0, %v1278
      %v1280 = vpop.f32.mrb[0].mxu0
      %1281 = vmatprep.mubr.f32.mxu0 0.0
      %1282 = vmatmul.mubr.f32.gmra.mrb[0].mxu0 %v1154
      %v1283 = vpop.f32.mrb[0].mxu0
      %v1284 = vadd.f32 0.0, %v1283
      %v1285 = vpop.f32.mrb[0].mxu0
      %1286 = vmatprep.mubr.f32.mxu0 0.0
      %1287 = vmatmul.mubr.f32.gmra.mrb[0].mxu0 %v1157
      %v1288 = vpop.f32.mrb[0].mxu0
      %v1289 = vadd.f32 0.0, %v1288
      %v1290 = vpop.f32.mrb[0].mxu0
      %1291 = vmatprep.mubr.f32.mxu0 0.0
      %1292 = vmatmul.mubr.f32.gmra.mrb[0].mxu0 %v1160
      %v1293 = vpop.f32.mrb[0].mxu0
      %v1294 = vadd.f32 0.0, %v1293
      %v1295 = vpop.f32.mrb[0].mxu0
      %1296 = vmatprep.mubr.f32.mxu0 0.0
      %1297 = vmatmul.mubr.f32.gmra.mrb[0].mxu0 %v1163
      %v1298 = vpop.f32.mrb[0].mxu0
      %v1299 = vadd.f32 0.0, %v1298
      %v1300 = vpop.f32.mrb[0].mxu0
      %1301 = vmatprep.mubr.f32.mxu0 0.0
      %1302 = vmatmul.mubr.f32.gmra.mrb[0].mxu0 %v1166
      %v1303 = vpop.f32.mrb[0].mxu0
      %v1304 = vadd.f32 0.0, %v1303
      %v1305 = vpop.f32.mrb[0].mxu0
      %1306 = vmatprep.mubr.f32.mxu0 0.0
      %1307 = vmatmul.mubr.f32.gmra.mrb[0].mxu0 %v1169
      %v1308 = vpop.f32.mrb[0].mxu0
      %v1309 = vadd.f32 0.0, %v1308
      %v1310 = vpop.f32.mrb[0].mxu0
      %1311 = vmatprep.mubr.f32.mxu0 0.0
      %1312 = vmatmul.mubr.f32.gmra.mrb[0].mxu0 %v1172
      %v1313 = vpop.f32.mrb[0].mxu0
      %v1314 = vadd.f32 0.0, %v1313
      %v1315 = vpop.f32.mrb[0].mxu0
      %1316 = vmatprep.mubr.f32.mxu0 0.0
      %1317 = vmatmul.mubr.f32.gmra.mrb[0].mxu0 %v1175
      %v1318 = vpop.f32.mrb[0].mxu0
      %v1319 = vadd.f32 0.0, %v1318
      %v1320 = vpop.f32.mrb[0].mxu0
      %1321 = vdwg.mxu0
      %v1322 = vld [vmem:[%s7] sm:$0xff]
      %v1323 = vld [vmem:[%s7 + $0x8] sm:$0xff]
      %v1324 = vld [vmem:[%s7 + $0x10] sm:$0xff]
      %v1325 = vld [vmem:[%s7 + $0x18] sm:$0xff]
      %v1326 = vld [vmem:[%s7 + $0x20] sm:$0xff]
      %v1327 = vld [vmem:[%s7 + $0x28] sm:$0xff]
      %v1328 = vld [vmem:[%s7 + $0x30] sm:$0xff]
      %v1329 = vld [vmem:[%s7 + $0x38] sm:$0xff]
      %v1330 = vld [vmem:[%s7 + $0x40] sm:$0xff]
      %v1331 = vld [vmem:[%s7 + $0x48] sm:$0xff]
      %v1332 = vld [vmem:[%s7 + $0x50] sm:$0xff]
      %v1333 = vld [vmem:[%s7 + $0x58] sm:$0xff]
      %v1334 = vld [vmem:[%s7 + $0x60] sm:$0xff]
      %v1335 = vld [vmem:[%s7 + $0x68] sm:$0xff]
      %v1336 = vld [vmem:[%s7 + $0x70] sm:$0xff]
      %v1337 = vld [vmem:[%s7 + $0x78] sm:$0xff]
      %v1338 = vld [vmem:[%s127] sm:$0x1]
      %1340 = vset.pattern.permute.xlu0 0
      %1341 = vperm.xlu0 %1340, %v1322
      %v1342 = vpop.permute.xlu0 %1341
      %1345 = vset.pattern.permute.xlu0 0
      %1346 = vperm.xlu0 %1345, %v1323
      %v1347 = vpop.permute.xlu0 %1346
      %1350 = vset.pattern.permute.xlu0 0
      %1351 = vperm.xlu0 %1350, %v1324
      %v1352 = vpop.permute.xlu0 %1351
      %1355 = vset.pattern.permute.xlu0 0
      %1356 = vperm.xlu0 %1355, %v1325
      %v1357 = vpop.permute.xlu0 %1356
      %1360 = vset.pattern.permute.xlu0 0
      %1361 = vperm.xlu0 %1360, %v1326
      %v1362 = vpop.permute.xlu0 %1361
      %1365 = vset.pattern.permute.xlu0 0
      %1366 = vperm.xlu0 %1365, %v1327
      %v1367 = vpop.permute.xlu0 %1366
      %1370 = vset.pattern.permute.xlu0 0
      %1371 = vperm.xlu0 %1370, %v1328
      %v1372 = vpop.permute.xlu0 %1371
      %1375 = vset.pattern.permute.xlu0 0
      %1376 = vperm.xlu0 %1375, %v1329
      %v1377 = vpop.permute.xlu0 %1376
      %1380 = vset.pattern.permute.xlu0 0
      %1381 = vperm.xlu0 %1380, %v1330
      %v1382 = vpop.permute.xlu0 %1381
      %1385 = vset.pattern.permute.xlu0 0
      %1386 = vperm.xlu0 %1385, %v1331
      %v1387 = vpop.permute.xlu0 %1386
      %1390 = vset.pattern.permute.xlu0 0
      %1391 = vperm.xlu0 %1390, %v1332
      %v1392 = vpop.permute.xlu0 %1391
      %1395 = vset.pattern.permute.xlu0 0
      %1396 = vperm.xlu0 %1395, %v1333
      %v1397 = vpop.permute.xlu0 %1396
      %1400 = vset.pattern.permute.xlu0 0
      %1401 = vperm.xlu0 %1400, %v1334
      %v1402 = vpop.permute.xlu0 %1401
      %1405 = vset.pattern.permute.xlu0 0
      %1406 = vperm.xlu0 %1405, %v1335
      %v1407 = vpop.permute.xlu0 %1406
      %1410 = vset.pattern.permute.xlu0 0
      %1411 = vperm.xlu0 %1410, %v1336
      %v1412 = vpop.permute.xlu0 %1411
      %1415 = vset.pattern.permute.xlu0 0
      %1416 = vperm.xlu0 %1415, %v1337
      %v1417 = vpop.permute.xlu0 %1416
      %v1420 = vlaneseq
      %v1421 = vshrl.u32 %v1420, 7
      %v1422 = vsub.s32 0, %v1421
      %v1423 = vrot.slane %v1338, %v1422
      %v1425 = vadd.f32 %v1342, %v1423
      %v1426 = vadd.f32 %v1347, %v1423
      %v1427 = vadd.f32 %v1352, %v1423
      %v1428 = vadd.f32 %v1357, %v1423
      %v1429 = vadd.f32 %v1362, %v1423
      %v1430 = vadd.f32 %v1367, %v1423
      %v1431 = vadd.f32 %v1372, %v1423
      %v1432 = vadd.f32 %v1377, %v1423
      %v1433 = vadd.f32 %v1382, %v1423
      %v1434 = vadd.f32 %v1387, %v1423
      %v1435 = vadd.f32 %v1392, %v1423
      %v1436 = vadd.f32 %v1397, %v1423
      %v1437 = vadd.f32 %v1402, %v1423
      %v1438 = vadd.f32 %v1407, %v1423
      %v1439 = vadd.f32 %v1412, %v1423
      %v1440 = vadd.f32 %v1417, %v1423
      %v1441 = vmul.f32 %v1244, 2.0
      %v1442 = vmul.f32 %v1249, 2.0
      %v1443 = vmul.f32 %v1254, 2.0
      %v1444 = vmul.f32 %v1259, 2.0
      %v1445 = vmul.f32 %v1264, 2.0
      %v1446 = vmul.f32 %v1269, 2.0
      %v1447 = vmul.f32 %v1274, 2.0
      %v1448 = vmul.f32 %v1279, 2.0
      %v1449 = vmul.f32 %v1284, 2.0
      %v1450 = vmul.f32 %v1289, 2.0
      %v1451 = vmul.f32 %v1294, 2.0
      %v1452 = vmul.f32 %v1299, 2.0
      %v1453 = vmul.f32 %v1304, 2.0
      %v1454 = vmul.f32 %v1309, 2.0
      %v1455 = vmul.f32 %v1314, 2.0
      %v1456 = vmul.f32 %v1319, 2.0
      %v1457 = vsub.f32 %v1425, %v1441
      %v1458 = vsub.f32 %v1426, %v1442
      %v1459 = vsub.f32 %v1427, %v1443
      %v1460 = vsub.f32 %v1428, %v1444
      %v1461 = vsub.f32 %v1429, %v1445
      %v1462 = vsub.f32 %v1430, %v1446
      %v1463 = vsub.f32 %v1431, %v1447
      %v1464 = vsub.f32 %v1432, %v1448
      %v1465 = vsub.f32 %v1433, %v1449
      %v1466 = vsub.f32 %v1434, %v1450
      %v1467 = vsub.f32 %v1435, %v1451
      %v1468 = vsub.f32 %v1436, %v1452
      %v1469 = vsub.f32 %v1437, %v1453
      %v1470 = vsub.f32 %v1438, %v1454
      %v1471 = vsub.f32 %v1439, %v1455
      %v1472 = vsub.f32 %v1440, %v1456
      %v1473 = vmax.f32 %v1457, 0.0
      %v1474 = vmax.f32 %v1458, 0.0
      %v1475 = vmax.f32 %v1459, 0.0
      %v1476 = vmax.f32 %v1460, 0.0
      %v1477 = vmax.f32 %v1461, 0.0
      %v1478 = vmax.f32 %v1462, 0.0
      %v1479 = vmax.f32 %v1463, 0.0
      %v1480 = vmax.f32 %v1464, 0.0
      %v1481 = vmax.f32 %v1465, 0.0
      %v1482 = vmax.f32 %v1466, 0.0
      %v1483 = vmax.f32 %v1467, 0.0
      %v1484 = vmax.f32 %v1468, 0.0
      %v1485 = vmax.f32 %v1469, 0.0
      %v1486 = vmax.f32 %v1470, 0.0
      %v1487 = vmax.f32 %v1471, 0.0
      %v1488 = vmax.f32 %v1472, 0.0
      %v1489 = vadd.f32 %v1473, 1e-06
      %v1490 = vadd.f32 %v1474, 1e-06
      %v1491 = vadd.f32 %v1475, 1e-06
      %v1492 = vadd.f32 %v1476, 1e-06
      %v1493 = vadd.f32 %v1477, 1e-06
      %v1494 = vadd.f32 %v1478, 1e-06
      %v1495 = vadd.f32 %v1479, 1e-06
      %v1496 = vadd.f32 %v1480, 1e-06
      %v1497 = vadd.f32 %v1481, 1e-06
      %v1498 = vadd.f32 %v1482, 1e-06
      %v1499 = vadd.f32 %v1483, 1e-06
      %v1500 = vadd.f32 %v1484, 1e-06
      %v1501 = vadd.f32 %v1485, 1e-06
      %v1502 = vadd.f32 %v1486, 1e-06
      %v1503 = vadd.f32 %v1487, 1e-06
      %v1504 = vadd.f32 %v1488, 1e-06
      %v1505 = vrsqrt.pop %v1489
      %v1506 = vmul.f32 %v1489, %v1505
      %vm1507 = vcmp.eq.f32.partialorder %v1489, inf
      %v1508 = vsel %vm1507, %v1489, %v1506
      %vm1509 = vcmp.eq.f32.partialorder %v1489, 0.0
      %v1510 = vand.u32 %v1489, 2147483648
      %v1511 = vsel %vm1509, %v1510, %v1508
      %v1512 = vrsqrt.pop %v1490
      %v1513 = vmul.f32 %v1490, %v1512
      %vm1514 = vcmp.eq.f32.partialorder %v1490, inf
      %v1515 = vsel %vm1514, %v1490, %v1513
      %vm1516 = vcmp.eq.f32.partialorder %v1490, 0.0
      %v1517 = vand.u32 %v1490, 2147483648
      %v1518 = vsel %vm1516, %v1517, %v1515
      %v1519 = vrsqrt.pop %v1491
      %v1520 = vmul.f32 %v1491, %v1519
      %vm1521 = vcmp.eq.f32.partialorder %v1491, inf
      %v1522 = vsel %vm1521, %v1491, %v1520
      %vm1523 = vcmp.eq.f32.partialorder %v1491, 0.0
      %v1524 = vand.u32 %v1491, 2147483648
      %v1525 = vsel %vm1523, %v1524, %v1522
      %v1526 = vrsqrt.pop %v1492
      %v1527 = vmul.f32 %v1492, %v1526
      %vm1528 = vcmp.eq.f32.partialorder %v1492, inf
      %v1529 = vsel %vm1528, %v1492, %v1527
      %vm1530 = vcmp.eq.f32.partialorder %v1492, 0.0
      %v1531 = vand.u32 %v1492, 2147483648
      %v1532 = vsel %vm1530, %v1531, %v1529
      %v1533 = vrsqrt.pop %v1493
      %v1534 = vmul.f32 %v1493, %v1533
      %vm1535 = vcmp.eq.f32.partialorder %v1493, inf
      %v1536 = vsel %vm1535, %v1493, %v1534
      %vm1537 = vcmp.eq.f32.partialorder %v1493, 0.0
      %v1538 = vand.u32 %v1493, 2147483648
      %v1539 = vsel %vm1537, %v1538, %v1536
      %v1540 = vrsqrt.pop %v1494
      %v1541 = vmul.f32 %v1494, %v1540
      %vm1542 = vcmp.eq.f32.partialorder %v1494, inf
      %v1543 = vsel %vm1542, %v1494, %v1541
      %vm1544 = vcmp.eq.f32.partialorder %v1494, 0.0
      %v1545 = vand.u32 %v1494, 2147483648
      %v1546 = vsel %vm1544, %v1545, %v1543
      %v1547 = vrsqrt.pop %v1495
      %v1548 = vmul.f32 %v1495, %v1547
      %vm1549 = vcmp.eq.f32.partialorder %v1495, inf
      %v1550 = vsel %vm1549, %v1495, %v1548
      %vm1551 = vcmp.eq.f32.partialorder %v1495, 0.0
      %v1552 = vand.u32 %v1495, 2147483648
      %v1553 = vsel %vm1551, %v1552, %v1550
      %v1554 = vrsqrt.pop %v1496
      %v1555 = vmul.f32 %v1496, %v1554
      %vm1556 = vcmp.eq.f32.partialorder %v1496, inf
      %v1557 = vsel %vm1556, %v1496, %v1555
      %vm1558 = vcmp.eq.f32.partialorder %v1496, 0.0
      %v1559 = vand.u32 %v1496, 2147483648
      %v1560 = vsel %vm1558, %v1559, %v1557
      %v1561 = vrsqrt.pop %v1497
      %v1562 = vmul.f32 %v1497, %v1561
      %vm1563 = vcmp.eq.f32.partialorder %v1497, inf
      %v1564 = vsel %vm1563, %v1497, %v1562
      %vm1565 = vcmp.eq.f32.partialorder %v1497, 0.0
      %v1566 = vand.u32 %v1497, 2147483648
      %v1567 = vsel %vm1565, %v1566, %v1564
      %v1568 = vrsqrt.pop %v1498
      %v1569 = vmul.f32 %v1498, %v1568
      %vm1570 = vcmp.eq.f32.partialorder %v1498, inf
      %v1571 = vsel %vm1570, %v1498, %v1569
      %vm1572 = vcmp.eq.f32.partialorder %v1498, 0.0
      %v1573 = vand.u32 %v1498, 2147483648
      %v1574 = vsel %vm1572, %v1573, %v1571
      %v1575 = vrsqrt.pop %v1499
      %v1576 = vmul.f32 %v1499, %v1575
      %vm1577 = vcmp.eq.f32.partialorder %v1499, inf
      %v1578 = vsel %vm1577, %v1499, %v1576
      %vm1579 = vcmp.eq.f32.partialorder %v1499, 0.0
      %v1580 = vand.u32 %v1499, 2147483648
      %v1581 = vsel %vm1579, %v1580, %v1578
      %v1582 = vrsqrt.pop %v1500
      %v1583 = vmul.f32 %v1500, %v1582
      %vm1584 = vcmp.eq.f32.partialorder %v1500, inf
      %v1585 = vsel %vm1584, %v1500, %v1583
      %vm1586 = vcmp.eq.f32.partialorder %v1500, 0.0
      %v1587 = vand.u32 %v1500, 2147483648
      %v1588 = vsel %vm1586, %v1587, %v1585
      %v1589 = vrsqrt.pop %v1501
      %v1590 = vmul.f32 %v1501, %v1589
      %vm1591 = vcmp.eq.f32.partialorder %v1501, inf
      %v1592 = vsel %vm1591, %v1501, %v1590
      %vm1593 = vcmp.eq.f32.partialorder %v1501, 0.0
      %v1594 = vand.u32 %v1501, 2147483648
      %v1595 = vsel %vm1593, %v1594, %v1592
      %v1596 = vrsqrt.pop %v1502
      %v1597 = vmul.f32 %v1502, %v1596
      %vm1598 = vcmp.eq.f32.partialorder %v1502, inf
      %v1599 = vsel %vm1598, %v1502, %v1597
      %vm1600 = vcmp.eq.f32.partialorder %v1502, 0.0
      %v1601 = vand.u32 %v1502, 2147483648
      %v1602 = vsel %vm1600, %v1601, %v1599
      %v1603 = vrsqrt.pop %v1503
      %v1604 = vmul.f32 %v1503, %v1603
      %vm1605 = vcmp.eq.f32.partialorder %v1503, inf
      %v1606 = vsel %vm1605, %v1503, %v1604
      %vm1607 = vcmp.eq.f32.partialorder %v1503, 0.0
      %v1608 = vand.u32 %v1503, 2147483648
      %v1609 = vsel %vm1607, %v1608, %v1606
      %v1610 = vrsqrt.pop %v1504
      %v1611 = vmul.f32 %v1504, %v1610
      %vm1612 = vcmp.eq.f32.partialorder %v1504, inf
      %v1613 = vsel %vm1612, %v1504, %v1611
      %vm1614 = vcmp.eq.f32.partialorder %v1504, 0.0
      %v1615 = vand.u32 %v1504, 2147483648
      %v1616 = vsel %vm1614, %v1615, %v1613
      %v1617 = vsub.f32 0.0, %v1511
      %v1618 = vsub.f32 0.0, %v1518
      %v1619 = vsub.f32 0.0, %v1525
      %v1620 = vsub.f32 0.0, %v1532
      %v1621 = vsub.f32 0.0, %v1539
      %v1622 = vsub.f32 0.0, %v1546
      %v1623 = vsub.f32 0.0, %v1553
      %v1624 = vsub.f32 0.0, %v1560
      %v1625 = vsub.f32 0.0, %v1567
      %v1626 = vsub.f32 0.0, %v1574
      %v1627 = vsub.f32 0.0, %v1581
      %v1628 = vsub.f32 0.0, %v1588
      %v1629 = vsub.f32 0.0, %v1595
      %v1630 = vsub.f32 0.0, %v1602
      %v1631 = vsub.f32 0.0, %v1609
      %v1632 = vsub.f32 0.0, %v1616
      %v1633 = vmul.f32 %v1617, 0.17677669
      %v1634 = vmul.f32 %v1618, 0.17677669
      %v1635 = vmul.f32 %v1619, 0.17677669
      %v1636 = vmul.f32 %v1620, 0.17677669
      %v1637 = vmul.f32 %v1621, 0.17677669
      %v1638 = vmul.f32 %v1622, 0.17677669
      %v1639 = vmul.f32 %v1623, 0.17677669
      %v1640 = vmul.f32 %v1624, 0.17677669
      %v1641 = vmul.f32 %v1625, 0.17677669
      %v1642 = vmul.f32 %v1626, 0.17677669
      %v1643 = vmul.f32 %v1627, 0.17677669
      %v1644 = vmul.f32 %v1628, 0.17677669
      %v1645 = vmul.f32 %v1629, 0.17677669
      %v1646 = vmul.f32 %v1630, 0.17677669
      %v1647 = vmul.f32 %v1631, 0.17677669
      %v1648 = vmul.f32 %v1632, 0.17677669
      %v1649 = vmax.f32 %v1633, -5.0
      %v1650 = vmax.f32 %v1634, -5.0
      %v1651 = vmax.f32 %v1635, -5.0
      %v1652 = vmax.f32 %v1636, -5.0
      %v1653 = vmax.f32 %v1637, -5.0
      %v1654 = vmax.f32 %v1638, -5.0
      %v1655 = vmax.f32 %v1639, -5.0
      %v1656 = vmax.f32 %v1640, -5.0
      %v1657 = vmax.f32 %v1641, -5.0
      %v1658 = vmax.f32 %v1642, -5.0
      %v1659 = vmax.f32 %v1643, -5.0
      %v1660 = vmax.f32 %v1644, -5.0
      %v1661 = vmax.f32 %v1645, -5.0
      %v1662 = vmax.f32 %v1646, -5.0
      %v1663 = vmax.f32 %v1647, -5.0
      %v1664 = vmax.f32 %v1648, -5.0
      %v1665 = vmul.f32 %v1649, 1.442695
      %v1666 = vpow.pop %v1665
      %v1667 = vmul.f32 %v1650, 1.442695
      %v1668 = vpow.pop %v1667
      %v1669 = vmul.f32 %v1651, 1.442695
      %v1670 = vpow.pop %v1669
      %v1671 = vmul.f32 %v1652, 1.442695
      %v1672 = vpow.pop %v1671
      %v1673 = vmul.f32 %v1653, 1.442695
      %v1674 = vpow.pop %v1673
      %v1675 = vmul.f32 %v1654, 1.442695
      %v1676 = vpow.pop %v1675
      %v1677 = vmul.f32 %v1655, 1.442695
      %v1678 = vpow.pop %v1677
      %v1679 = vmul.f32 %v1656, 1.442695
      %v1680 = vpow.pop %v1679
      %v1681 = vmul.f32 %v1657, 1.442695
      %v1682 = vpow.pop %v1681
      %v1683 = vmul.f32 %v1658, 1.442695
      %v1684 = vpow.pop %v1683
      %v1685 = vmul.f32 %v1659, 1.442695
      %v1686 = vpow.pop %v1685
      %v1687 = vmul.f32 %v1660, 1.442695
      %v1688 = vpow.pop %v1687
      %v1689 = vmul.f32 %v1661, 1.442695
      %v1690 = vpow.pop %v1689
      %v1691 = vmul.f32 %v1662, 1.442695
      %v1692 = vpow.pop %v1691
      %v1693 = vmul.f32 %v1663, 1.442695
      %v1694 = vpow.pop %v1693
      %v1695 = vmul.f32 %v1664, 1.442695
      %v1696 = vpow.pop %v1695
      %v1697 = vmul.f32 %v1095, %v1666
      %v1698 = vmul.f32 %v1096, %v1668
      %v1699 = vmul.f32 %v1097, %v1670
      %v1700 = vmul.f32 %v1098, %v1672
      %v1701 = vmul.f32 %v1099, %v1674
      %v1702 = vmul.f32 %v1100, %v1676
      %v1703 = vmul.f32 %v1101, %v1678
      %v1704 = vmul.f32 %v1102, %v1680
      %v1705 = vmul.f32 %v1103, %v1682
      %v1706 = vmul.f32 %v1104, %v1684
      %v1707 = vmul.f32 %v1105, %v1686
      %v1708 = vmul.f32 %v1106, %v1688
      %v1709 = vmul.f32 %v1107, %v1690
      %v1710 = vmul.f32 %v1108, %v1692
      %v1711 = vmul.f32 %v1109, %v1694
      %v1712 = vmul.f32 %v1110, %v1696
      %v1713 = vld [vmem:[#allocation2] sm:$0xff]
      %v1714 = vld [vmem:[#allocation2 + $0x8] sm:$0xff]
      %v1715 = vld [vmem:[#allocation2 + $0x10] sm:$0xff]
      %v1716 = vld [vmem:[#allocation2 + $0x18] sm:$0xff]
      %v1717 = vld [vmem:[#allocation2 + $0x20] sm:$0xff]
      %v1718 = vld [vmem:[#allocation2 + $0x28] sm:$0xff]
      %v1719 = vld [vmem:[#allocation2 + $0x30] sm:$0xff]
      %v1720 = vld [vmem:[#allocation2 + $0x38] sm:$0xff]
      %v1721 = vld [vmem:[#allocation2 + $0x40] sm:$0xff]
      %v1722 = vld [vmem:[#allocation2 + $0x48] sm:$0xff]
      %v1723 = vld [vmem:[#allocation2 + $0x50] sm:$0xff]
      %v1724 = vld [vmem:[#allocation2 + $0x58] sm:$0xff]
      %v1725 = vld [vmem:[#allocation2 + $0x60] sm:$0xff]
      %v1726 = vld [vmem:[#allocation2 + $0x68] sm:$0xff]
      %v1727 = vld [vmem:[#allocation2 + $0x70] sm:$0xff]
      %v1728 = vld [vmem:[#allocation2 + $0x78] sm:$0xff]
      %1729 = vmatprep.subr.mxu0 0.0
      %1730 = vmatpush1.msra.mxu0 %v178
      %1731 = vmatprep.subr.mxu0 0.0
      %1732 = vmatpush1.msra.mxu0 %v180
      %1733 = vmatprep.subr.mxu0 0.0
      %1734 = vmatpush1.msra.mxu0 %v182
      %1735 = vmatprep.subr.mxu0 0.0
      %1736 = vmatpush1.msra.mxu0 %v184
      %1737 = vmatprep.subr.mxu0 0.0
      %1738 = vmatpush1.msra.mxu0 %v186
      %1739 = vmatprep.subr.mxu0 0.0
      %1740 = vmatpush1.msra.mxu0 %v188
      %1741 = vmatprep.subr.mxu0 0.0
      %1742 = vmatpush1.msra.mxu0 %v190
      %1743 = vmatprep.subr.mxu0 0.0
      %1744 = vmatpush1.msra.mxu0 %v192
      %1745 = vmatprep.subr.mxu0 0.0
      %1746 = vmatpush1.msra.mxu0 %v194
      %1747 = vmatprep.subr.mxu0 0.0
      %1748 = vmatpush1.msra.mxu0 %v196
      %1749 = vmatprep.subr.mxu0 0.0
      %1750 = vmatpush1.msra.mxu0 %v198
      %1751 = vmatprep.subr.mxu0 0.0
      %1752 = vmatpush1.msra.mxu0 %v200
      %1753 = vmatprep.subr.mxu0 0.0
      %1754 = vmatpush1.msra.mxu0 %v202
      %1755 = vmatprep.subr.mxu0 0.0
      %1756 = vmatpush1.msra.mxu0 %v204
      %1757 = vmatprep.subr.mxu0 0.0
      %1758 = vmatpush1.msra.mxu0 %v206
      %1759 = vmatprep.subr.mxu0 0.0
      %1760 = vmatpush1.msra.mxu0 %v208
      %1761 = vmatprep.subr.mxu0 0.0
      %1762 = vmatpush1.msra.mxu0 0.0
      %1763 = vmatprep.subr.mxu0 0.0
      %1764 = vmatpush1.msra.mxu0 0.0
      %1765 = vmatprep.subr.mxu0 0.0
      %1766 = vmatpush1.msra.mxu0 0.0
      %1767 = vmatprep.subr.mxu0 0.0
      %1768 = vmatpush1.msra.mxu0 0.0
      %1769 = vmatprep.subr.mxu0 0.0
      %1770 = vmatpush1.msra.mxu0 0.0
      %1771 = vmatprep.subr.mxu0 0.0
      %1772 = vmatpush1.msra.mxu0 0.0
      %1773 = vmatprep.subr.mxu0 0.0
      %1774 = vmatpush1.msra.mxu0 0.0
      %1775 = vmatprep.subr.mxu0 0.0
      %1776 = vmatpush1.msra.mxu0 0.0
      %1777 = vmatprep.subr.mxu0 0.0
      %1778 = vmatpush1.msra.mxu0 0.0
      %1779 = vmatprep.subr.mxu0 0.0
      %1780 = vmatpush1.msra.mxu0 0.0
      %1781 = vmatprep.subr.mxu0 0.0
      %1782 = vmatpush1.msra.mxu0 0.0
      %1783 = vmatprep.subr.mxu0 0.0
      %1784 = vmatpush1.msra.mxu0 0.0
      %1785 = vmatprep.subr.mxu0 0.0
      %1786 = vmatpush1.msra.mxu0 0.0
      %1787 = vmatprep.subr.mxu0 0.0
      %1788 = vmatpush1.msra.mxu0 0.0
      %1789 = vmatprep.subr.mxu0 0.0
      %1790 = vmatpush1.msra.mxu0 0.0
      %1791 = vmatprep.subr.mxu0 0.0
      %1792 = vmatpush1.msra.mxu0 0.0
      %1793 = vmatprep.mubr.f32.mxu0 0.0
      %1794 = vmatmul.mubr.f32.gmra.mrb[0].mxu0 %v1697
      %v1795 = vpop.f32.mrb[0].mxu0
      %v1796 = vadd.f32 0.0, %v1795
      %v1797 = vpop.f32.mrb[0].mxu0
      %1798 = vmatprep.mubr.f32.mxu0 0.0
      %1799 = vmatmul.mubr.f32.gmra.mrb[0].mxu0 %v1698
      %v1800 = vpop.f32.mrb[0].mxu0
      %v1801 = vadd.f32 0.0, %v1800
      %v1802 = vpop.f32.mrb[0].mxu0
      %1803 = vmatprep.mubr.f32.mxu0 0.0
      %1804 = vmatmul.mubr.f32.gmra.mrb[0].mxu0 %v1699
      %v1805 = vpop.f32.mrb[0].mxu0
      %v1806 = vadd.f32 0.0, %v1805
      %v1807 = vpop.f32.mrb[0].mxu0
      %1808 = vmatprep.mubr.f32.mxu0 0.0
      %1809 = vmatmul.mubr.f32.gmra.mrb[0].mxu0 %v1700
      %v1810 = vpop.f32.mrb[0].mxu0
      %v1811 = vadd.f32 0.0, %v1810
      %v1812 = vpop.f32.mrb[0].mxu0
      %1813 = vmatprep.mubr.f32.mxu0 0.0
      %1814 = vmatmul.mubr.f32.gmra.mrb[0].mxu0 %v1701
      %v1815 = vpop.f32.mrb[0].mxu0
      %v1816 = vadd.f32 0.0, %v1815
      %v1817 = vpop.f32.mrb[0].mxu0
      %1818 = vmatprep.mubr.f32.mxu0 0.0
      %1819 = vmatmul.mubr.f32.gmra.mrb[0].mxu0 %v1702
      %v1820 = vpop.f32.mrb[0].mxu0
      %v1821 = vadd.f32 0.0, %v1820
      %v1822 = vpop.f32.mrb[0].mxu0
      %1823 = vmatprep.mubr.f32.mxu0 0.0
      %1824 = vmatmul.mubr.f32.gmra.mrb[0].mxu0 %v1703
      %v1825 = vpop.f32.mrb[0].mxu0
      %v1826 = vadd.f32 0.0, %v1825
      %v1827 = vpop.f32.mrb[0].mxu0
      %1828 = vmatprep.mubr.f32.mxu0 0.0
      %1829 = vmatmul.mubr.f32.gmra.mrb[0].mxu0 %v1704
      %v1830 = vpop.f32.mrb[0].mxu0
      %v1831 = vadd.f32 0.0, %v1830
      %v1832 = vpop.f32.mrb[0].mxu0
      %1833 = vmatprep.mubr.f32.mxu0 0.0
      %1834 = vmatmul.mubr.f32.gmra.mrb[0].mxu0 %v1705
      %v1835 = vpop.f32.mrb[0].mxu0
      %v1836 = vadd.f32 0.0, %v1835
      %v1837 = vpop.f32.mrb[0].mxu0
      %1838 = vmatprep.mubr.f32.mxu0 0.0
      %1839 = vmatmul.mubr.f32.gmra.mrb[0].mxu0 %v1706
      %v1840 = vpop.f32.mrb[0].mxu0
      %v1841 = vadd.f32 0.0, %v1840
      %v1842 = vpop.f32.mrb[0].mxu0
      %1843 = vmatprep.mubr.f32.mxu0 0.0
      %1844 = vmatmul.mubr.f32.gmra.mrb[0].mxu0 %v1707
      %v1845 = vpop.f32.mrb[0].mxu0
      %v1846 = vadd.f32 0.0, %v1845
      %v1847 = vpop.f32.mrb[0].mxu0
      %1848 = vmatprep.mubr.f32.mxu0 0.0
      %1849 = vmatmul.mubr.f32.gmra.mrb[0].mxu0 %v1708
      %v1850 = vpop.f32.mrb[0].mxu0
      %v1851 = vadd.f32 0.0, %v1850
      %v1852 = vpop.f32.mrb[0].mxu0
      %1853 = vmatprep.mubr.f32.mxu0 0.0
      %1854 = vmatmul.mubr.f32.gmra.mrb[0].mxu0 %v1709
      %v1855 = vpop.f32.mrb[0].mxu0
      %v1856 = vadd.f32 0.0, %v1855
      %v1857 = vpop.f32.mrb[0].mxu0
      %1858 = vmatprep.mubr.f32.mxu0 0.0
      %1859 = vmatmul.mubr.f32.gmra.mrb[0].mxu0 %v1710
      %v1860 = vpop.f32.mrb[0].mxu0
      %v1861 = vadd.f32 0.0, %v1860
      %v1862 = vpop.f32.mrb[0].mxu0
      %1863 = vmatprep.mubr.f32.mxu0 0.0
      %1864 = vmatmul.mubr.f32.gmra.mrb[0].mxu0 %v1711
      %v1865 = vpop.f32.mrb[0].mxu0
      %v1866 = vadd.f32 0.0, %v1865
      %v1867 = vpop.f32.mrb[0].mxu0
      %1868 = vmatprep.mubr.f32.mxu0 0.0
      %1869 = vmatmul.mubr.f32.gmra.mrb[0].mxu0 %v1712
      %v1870 = vpop.f32.mrb[0].mxu0
      %v1871 = vadd.f32 0.0, %v1870
      %v1872 = vpop.f32.mrb[0].mxu0
      %1873 = vdwg.mxu0
      %v1874 = vadd.f32 %v1713, %v1796
      %v1875 = vadd.f32 %v1714, %v1801
      %v1876 = vadd.f32 %v1715, %v1806
      %v1877 = vadd.f32 %v1716, %v1811
      %v1878 = vadd.f32 %v1717, %v1816
      %v1879 = vadd.f32 %v1718, %v1821
      %v1880 = vadd.f32 %v1719, %v1826
      %v1881 = vadd.f32 %v1720, %v1831
      %v1882 = vadd.f32 %v1721, %v1836
      %v1883 = vadd.f32 %v1722, %v1841
      %v1884 = vadd.f32 %v1723, %v1846
      %v1885 = vadd.f32 %v1724, %v1851
      %v1886 = vadd.f32 %v1725, %v1856
      %v1887 = vadd.f32 %v1726, %v1861
      %v1888 = vadd.f32 %v1727, %v1866
      %v1889 = vadd.f32 %v1728, %v1871
      %1890 = vst [vmem:[#allocation2] sm:$0xff] %v1874
      %1891 = vst [vmem:[#allocation2 + $0x8] sm:$0xff] %v1875
      %1892 = vst [vmem:[#allocation2 + $0x10] sm:$0xff] %v1876
      %1893 = vst [vmem:[#allocation2 + $0x18] sm:$0xff] %v1877
      %1894 = vst [vmem:[#allocation2 + $0x20] sm:$0xff] %v1878
      %1895 = vst [vmem:[#allocation2 + $0x28] sm:$0xff] %v1879
      %1896 = vst [vmem:[#allocation2 + $0x30] sm:$0xff] %v1880
      %1897 = vst [vmem:[#allocation2 + $0x38] sm:$0xff] %v1881
      %1898 = vst [vmem:[#allocation2 + $0x40] sm:$0xff] %v1882
      %1899 = vst [vmem:[#allocation2 + $0x48] sm:$0xff] %v1883
      %1900 = vst [vmem:[#allocation2 + $0x50] sm:$0xff] %v1884
      %1901 = vst [vmem:[#allocation2 + $0x58] sm:$0xff] %v1885
      %1902 = vst [vmem:[#allocation2 + $0x60] sm:$0xff] %v1886
      %1903 = vst [vmem:[#allocation2 + $0x68] sm:$0xff] %v1887
      %1904 = vst [vmem:[#allocation2 + $0x70] sm:$0xff] %v1888
      %1905 = vst [vmem:[#allocation2 + $0x78] sm:$0xff] %v1889
      %v1906 = vld [vmem:[#allocation3] sm:$0xff]
      %v1907 = vld [vmem:[#allocation3 + $0x8] sm:$0xff]
      %v1908 = vld [vmem:[#allocation3 + $0x10] sm:$0xff]
      %v1909 = vld [vmem:[#allocation3 + $0x18] sm:$0xff]
      %v1910 = vld [vmem:[#allocation3 + $0x20] sm:$0xff]
      %v1911 = vld [vmem:[#allocation3 + $0x28] sm:$0xff]
      %v1912 = vld [vmem:[#allocation3 + $0x30] sm:$0xff]
      %v1913 = vld [vmem:[#allocation3 + $0x38] sm:$0xff]
      %v1914 = vld [vmem:[#allocation3 + $0x40] sm:$0xff]
      %v1915 = vld [vmem:[#allocation3 + $0x48] sm:$0xff]
      %v1916 = vld [vmem:[#allocation3 + $0x50] sm:$0xff]
      %v1917 = vld [vmem:[#allocation3 + $0x58] sm:$0xff]
      %v1918 = vld [vmem:[#allocation3 + $0x60] sm:$0xff]
      %v1919 = vld [vmem:[#allocation3 + $0x68] sm:$0xff]
      %v1920 = vld [vmem:[#allocation3 + $0x70] sm:$0xff]
      %v1921 = vld [vmem:[#allocation3 + $0x78] sm:$0xff]
      %1922 = vadd.xlane.f32.xlu0 %v1095
      %v1923 = vpop.xlane.xlu0 %1922
      %1924 = vadd.xlane.f32.xlu0 %v1096
      %v1925 = vpop.xlane.xlu0 %1924
      %1926 = vadd.xlane.f32.xlu0 %v1097
      %v1927 = vpop.xlane.xlu0 %1926
      %1928 = vadd.xlane.f32.xlu0 %v1098
      %v1929 = vpop.xlane.xlu0 %1928
      %1930 = vadd.xlane.f32.xlu0 %v1099
      %v1931 = vpop.xlane.xlu0 %1930
      %1932 = vadd.xlane.f32.xlu0 %v1100
      %v1933 = vpop.xlane.xlu0 %1932
      %1934 = vadd.xlane.f32.xlu0 %v1101
      %v1935 = vpop.xlane.xlu0 %1934
      %1936 = vadd.xlane.f32.xlu0 %v1102
      %v1937 = vpop.xlane.xlu0 %1936
      %1938 = vadd.xlane.f32.xlu0 %v1103
      %v1939 = vpop.xlane.xlu0 %1938
      %1940 = vadd.xlane.f32.xlu0 %v1104
      %v1941 = vpop.xlane.xlu0 %1940
      %1942 = vadd.xlane.f32.xlu0 %v1105
      %v1943 = vpop.xlane.xlu0 %1942
      %1944 = vadd.xlane.f32.xlu0 %v1106
      %v1945 = vpop.xlane.xlu0 %1944
      %1946 = vadd.xlane.f32.xlu0 %v1107
      %v1947 = vpop.xlane.xlu0 %1946
      %1948 = vadd.xlane.f32.xlu0 %v1108
      %v1949 = vpop.xlane.xlu0 %1948
      %1950 = vadd.xlane.f32.xlu0 %v1109
      %v1951 = vpop.xlane.xlu0 %1950
      %1952 = vadd.xlane.f32.xlu0 %v1110
      %v1953 = vpop.xlane.xlu0 %1952
      %v1954 = vadd.f32 %v1906, %v1923
      %v1955 = vadd.f32 %v1907, %v1925
      %v1956 = vadd.f32 %v1908, %v1927
      %v1957 = vadd.f32 %v1909, %v1929
      %v1958 = vadd.f32 %v1910, %v1931
      %v1959 = vadd.f32 %v1911, %v1933
      %v1960 = vadd.f32 %v1912, %v1935
      %v1961 = vadd.f32 %v1913, %v1937
      %v1962 = vadd.f32 %v1914, %v1939
      %v1963 = vadd.f32 %v1915, %v1941
      %v1964 = vadd.f32 %v1916, %v1943
      %v1965 = vadd.f32 %v1917, %v1945
      %v1966 = vadd.f32 %v1918, %v1947
      %v1967 = vadd.f32 %v1919, %v1949
      %v1968 = vadd.f32 %v1920, %v1951
      %v1969 = vadd.f32 %v1921, %v1953
      %vm1970 = vcmask 7168
      %1971 = vst.msk [vmem:[#allocation3] sm:$0xff] %vm1970, %v1954
      %1972 = vst.msk [vmem:[#allocation3 + $0x8] sm:$0xff] %vm1970, %v1955
      %1973 = vst.msk [vmem:[#allocation3 + $0x10] sm:$0xff] %vm1970, %v1956
      %1974 = vst.msk [vmem:[#allocation3 + $0x18] sm:$0xff] %vm1970, %v1957
      %1975 = vst.msk [vmem:[#allocation3 + $0x20] sm:$0xff] %vm1970, %v1958
      %1976 = vst.msk [vmem:[#allocation3 + $0x28] sm:$0xff] %vm1970, %v1959
      %1977 = vst.msk [vmem:[#allocation3 + $0x30] sm:$0xff] %vm1970, %v1960
      %1978 = vst.msk [vmem:[#allocation3 + $0x38] sm:$0xff] %vm1970, %v1961
      %1979 = vst.msk [vmem:[#allocation3 + $0x40] sm:$0xff] %vm1970, %v1962
      %1980 = vst.msk [vmem:[#allocation3 + $0x48] sm:$0xff] %vm1970, %v1963
      %1981 = vst.msk [vmem:[#allocation3 + $0x50] sm:$0xff] %vm1970, %v1964
      %1982 = vst.msk [vmem:[#allocation3 + $0x58] sm:$0xff] %vm1970, %v1965
      %1983 = vst.msk [vmem:[#allocation3 + $0x60] sm:$0xff] %vm1970, %v1966
      %1984 = vst.msk [vmem:[#allocation3 + $0x68] sm:$0xff] %vm1970, %v1967
      %1985 = vst.msk [vmem:[#allocation3 + $0x70] sm:$0xff] %vm1970, %v1968
      %1986 = vst.msk [vmem:[#allocation3 + $0x78] sm:$0xff] %vm1970, %v1969
    $region37: #{tpu_custom_call.1} parent=1 // pred_fallthru
      _
    // Predicated region
    $region38: #{tpu_custom_call.1} parent=1 // pred_check
      %p1987 = pneg %p132
    $region39: #{tpu_custom_call.1} parent=1 // pred_check_branch
      %1989 = sbr.rel (%p1987) target = $region41
    $region40: #{tpu_custom_call.1} parent=1 // pred_region
      %v1990 = vld [vmem:[#allocation3] sm:$0xff]
      %v1991 = vld [vmem:[#allocation3 + $0x8] sm:$0xff]
      %v1992 = vld [vmem:[#allocation3 + $0x10] sm:$0xff]
      %v1993 = vld [vmem:[#allocation3 + $0x18] sm:$0xff]
      %v1994 = vld [vmem:[#allocation3 + $0x20] sm:$0xff]
      %v1995 = vld [vmem:[#allocation3 + $0x28] sm:$0xff]
      %v1996 = vld [vmem:[#allocation3 + $0x30] sm:$0xff]
      %v1997 = vld [vmem:[#allocation3 + $0x38] sm:$0xff]
      %v1998 = vld [vmem:[#allocation3 + $0x40] sm:$0xff]
      %v1999 = vld [vmem:[#allocation3 + $0x48] sm:$0xff]
      %v2000 = vld [vmem:[#allocation3 + $0x50] sm:$0xff]
      %v2001 = vld [vmem:[#allocation3 + $0x58] sm:$0xff]
      %v2002 = vld [vmem:[#allocation3 + $0x60] sm:$0xff]
      %v2003 = vld [vmem:[#allocation3 + $0x68] sm:$0xff]
      %v2004 = vld [vmem:[#allocation3 + $0x70] sm:$0xff]
      %v2005 = vld [vmem:[#allocation3 + $0x78] sm:$0xff]
      %v2006 = vmax.f32 %v1990, 1e-30
      %v2007 = vmax.f32 %v1991, 1e-30
      %v2008 = vmax.f32 %v1992, 1e-30
      %v2009 = vmax.f32 %v1993, 1e-30
      %v2010 = vmax.f32 %v1994, 1e-30
      %v2011 = vmax.f32 %v1995, 1e-30
      %v2012 = vmax.f32 %v1996, 1e-30
      %v2013 = vmax.f32 %v1997, 1e-30
      %v2014 = vmax.f32 %v1998, 1e-30
      %v2015 = vmax.f32 %v1999, 1e-30
      %v2016 = vmax.f32 %v2000, 1e-30
      %v2017 = vmax.f32 %v2001, 1e-30
      %v2018 = vmax.f32 %v2002, 1e-30
      %v2019 = vmax.f32 %v2003, 1e-30
      %v2020 = vmax.f32 %v2004, 1e-30
      %v2021 = vmax.f32 %v2005, 1e-30
      %v2022 = vrcp.pop %v2006
      %v2023 = vrcp.pop %v2007
      %v2024 = vrcp.pop %v2008
      %v2025 = vrcp.pop %v2009
      %v2026 = vrcp.pop %v2010
      %v2027 = vrcp.pop %v2011
      %v2028 = vrcp.pop %v2012
      %v2029 = vrcp.pop %v2013
      %v2030 = vrcp.pop %v2014
      %v2031 = vrcp.pop %v2015
      %v2032 = vrcp.pop %v2016
      %v2033 = vrcp.pop %v2017
      %v2034 = vrcp.pop %v2018
      %v2035 = vrcp.pop %v2019
      %v2036 = vrcp.pop %v2020
      %v2037 = vrcp.pop %v2021
      %vm2038 = vcmp.gt.f32.partialorder %v1990, 0.0
      %vm2039 = vcmp.gt.f32.partialorder %v1991, 0.0
      %vm2040 = vcmp.gt.f32.partialorder %v1992, 0.0
      %vm2041 = vcmp.gt.f32.partialorder %v1993, 0.0
      %vm2042 = vcmp.gt.f32.partialorder %v1994, 0.0
      %vm2043 = vcmp.gt.f32.partialorder %v1995, 0.0
      %vm2044 = vcmp.gt.f32.partialorder %v1996, 0.0
      %vm2045 = vcmp.gt.f32.partialorder %v1997, 0.0
      %vm2046 = vcmp.gt.f32.partialorder %v1998, 0.0
      %vm2047 = vcmp.gt.f32.partialorder %v1999, 0.0
      %vm2048 = vcmp.gt.f32.partialorder %v2000, 0.0
      %vm2049 = vcmp.gt.f32.partialorder %v2001, 0.0
      %vm2050 = vcmp.gt.f32.partialorder %v2002, 0.0
      %vm2051 = vcmp.gt.f32.partialorder %v2003, 0.0
      %vm2052 = vcmp.gt.f32.partialorder %v2004, 0.0
      %vm2053 = vcmp.gt.f32.partialorder %v2005, 0.0
      %v2054 = vld [vmem:[#allocation2] sm:$0xff]
      %v2055 = vld [vmem:[#allocation2 + $0x8] sm:$0xff]
      %v2056 = vld [vmem:[#allocation2 + $0x10] sm:$0xff]
      %v2057 = vld [vmem:[#allocation2 + $0x18] sm:$0xff]
      %v2058 = vld [vmem:[#allocation2 + $0x20] sm:$0xff]
      %v2059 = vld [vmem:[#allocation2 + $0x28] sm:$0xff]
      %v2060 = vld [vmem:[#allocation2 + $0x30] sm:$0xff]
      %v2061 = vld [vmem:[#allocation2 + $0x38] sm:$0xff]
      %v2062 = vld [vmem:[#allocation2 + $0x40] sm:$0xff]
      %v2063 = vld [vmem:[#allocation2 + $0x48] sm:$0xff]
      %v2064 = vld [vmem:[#allocation2 + $0x50] sm:$0xff]
      %v2065 = vld [vmem:[#allocation2 + $0x58] sm:$0xff]
      %v2066 = vld [vmem:[#allocation2 + $0x60] sm:$0xff]
      %v2067 = vld [vmem:[#allocation2 + $0x68] sm:$0xff]
      %v2068 = vld [vmem:[#allocation2 + $0x70] sm:$0xff]
      %v2069 = vld [vmem:[#allocation2 + $0x78] sm:$0xff]
      %2071 = vset.pattern.permute.xlu0 0
      %2072 = vperm.xlu0 %2071, %v2022
      %v2073 = vpop.permute.xlu0 %2072
      %2076 = vset.pattern.permute.xlu0 0
      %2077 = vperm.xlu0 %2076, %v2023
      %v2078 = vpop.permute.xlu0 %2077
      %2081 = vset.pattern.permute.xlu0 0
      %2082 = vperm.xlu0 %2081, %v2024
      %v2083 = vpop.permute.xlu0 %2082
      %2086 = vset.pattern.permute.xlu0 0
      %2087 = vperm.xlu0 %2086, %v2025
      %v2088 = vpop.permute.xlu0 %2087
      %2091 = vset.pattern.permute.xlu0 0
      %2092 = vperm.xlu0 %2091, %v2026
      %v2093 = vpop.permute.xlu0 %2092
      %2096 = vset.pattern.permute.xlu0 0
      %2097 = vperm.xlu0 %2096, %v2027
      %v2098 = vpop.permute.xlu0 %2097
      %2101 = vset.pattern.permute.xlu0 0
      %2102 = vperm.xlu0 %2101, %v2028
      %v2103 = vpop.permute.xlu0 %2102
      %2106 = vset.pattern.permute.xlu0 0
      %2107 = vperm.xlu0 %2106, %v2029
      %v2108 = vpop.permute.xlu0 %2107
      %2111 = vset.pattern.permute.xlu0 0
      %2112 = vperm.xlu0 %2111, %v2030
      %v2113 = vpop.permute.xlu0 %2112
      %2116 = vset.pattern.permute.xlu0 0
      %2117 = vperm.xlu0 %2116, %v2031
      %v2118 = vpop.permute.xlu0 %2117
      %2121 = vset.pattern.permute.xlu0 0
      %2122 = vperm.xlu0 %2121, %v2032
      %v2123 = vpop.permute.xlu0 %2122
      %2126 = vset.pattern.permute.xlu0 0
      %2127 = vperm.xlu0 %2126, %v2033
      %v2128 = vpop.permute.xlu0 %2127
      %2131 = vset.pattern.permute.xlu0 0
      %2132 = vperm.xlu0 %2131, %v2034
      %v2133 = vpop.permute.xlu0 %2132
      %2136 = vset.pattern.permute.xlu0 0
      %2137 = vperm.xlu0 %2136, %v2035
      %v2138 = vpop.permute.xlu0 %2137
      %2141 = vset.pattern.permute.xlu0 0
      %2142 = vperm.xlu0 %2141, %v2036
      %v2143 = vpop.permute.xlu0 %2142
      %2146 = vset.pattern.permute.xlu0 0
      %2147 = vperm.xlu0 %2146, %v2037
      %v2148 = vpop.permute.xlu0 %2147
      %v2150 = vmul.f32 %v2054, %v2073
      %v2151 = vmul.f32 %v2055, %v2078
      %v2152 = vmul.f32 %v2056, %v2083
      %v2153 = vmul.f32 %v2057, %v2088
      %v2154 = vmul.f32 %v2058, %v2093
      %v2155 = vmul.f32 %v2059, %v2098
      %v2156 = vmul.f32 %v2060, %v2103
      %v2157 = vmul.f32 %v2061, %v2108
      %v2158 = vmul.f32 %v2062, %v2113
      %v2159 = vmul.f32 %v2063, %v2118
      %v2160 = vmul.f32 %v2064, %v2123
      %v2161 = vmul.f32 %v2065, %v2128
      %v2162 = vmul.f32 %v2066, %v2133
      %v2163 = vmul.f32 %v2067, %v2138
      %v2164 = vmul.f32 %v2068, %v2143
      %v2165 = vmul.f32 %v2069, %v2148
      %v2166 = vsel %vm2038, 1, 0
      %v2167 = vsel %vm2039, 1, 0
      %v2168 = vsel %vm2040, 1, 0
      %v2169 = vsel %vm2041, 1, 0
      %v2170 = vsel %vm2042, 1, 0
      %v2171 = vsel %vm2043, 1, 0
      %v2172 = vsel %vm2044, 1, 0
      %v2173 = vsel %vm2045, 1, 0
      %v2174 = vsel %vm2046, 1, 0
      %v2175 = vsel %vm2047, 1, 0
      %v2176 = vsel %vm2048, 1, 0
      %v2177 = vsel %vm2049, 1, 0
      %v2178 = vsel %vm2050, 1, 0
      %v2179 = vsel %vm2051, 1, 0
      %v2180 = vsel %vm2052, 1, 0
      %v2181 = vsel %vm2053, 1, 0
      %2182 = vset.pattern.permute.xlu0 0
      %2183 = vperm.xlu0 %2182, %v2166
      %v2184 = vpop.permute.xlu0 %2183
      %2185 = vset.pattern.permute.xlu0 0
      %2186 = vperm.xlu0 %2185, %v2167
      %v2187 = vpop.permute.xlu0 %2186
      %2188 = vset.pattern.permute.xlu0 0
      %2189 = vperm.xlu0 %2188, %v2168
      %v2190 = vpop.permute.xlu0 %2189
      %2191 = vset.pattern.permute.xlu0 0
      %2192 = vperm.xlu0 %2191, %v2169
      %v2193 = vpop.permute.xlu0 %2192
      %2194 = vset.pattern.permute.xlu0 0
      %2195 = vperm.xlu0 %2194, %v2170
      %v2196 = vpop.permute.xlu0 %2195
      %2197 = vset.pattern.permute.xlu0 0
      %2198 = vperm.xlu0 %2197, %v2171
      %v2199 = vpop.permute.xlu0 %2198
      %2200 = vset.pattern.permute.xlu0 0
      %2201 = vperm.xlu0 %2200, %v2172
      %v2202 = vpop.permute.xlu0 %2201
      %2203 = vset.pattern.permute.xlu0 0
      %2204 = vperm.xlu0 %2203, %v2173
      %v2205 = vpop.permute.xlu0 %2204
      %2206 = vset.pattern.permute.xlu0 0
      %2207 = vperm.xlu0 %2206, %v2174
      %v2208 = vpop.permute.xlu0 %2207
      %2209 = vset.pattern.permute.xlu0 0
      %2210 = vperm.xlu0 %2209, %v2175
      %v2211 = vpop.permute.xlu0 %2210
      %2212 = vset.pattern.permute.xlu0 0
      %2213 = vperm.xlu0 %2212, %v2176
      %v2214 = vpop.permute.xlu0 %2213
      %2215 = vset.pattern.permute.xlu0 0
      %2216 = vperm.xlu0 %2215, %v2177
      %v2217 = vpop.permute.xlu0 %2216
      %2218 = vset.pattern.permute.xlu0 0
      %2219 = vperm.xlu0 %2218, %v2178
      %v2220 = vpop.permute.xlu0 %2219
      %2221 = vset.pattern.permute.xlu0 0
      %2222 = vperm.xlu0 %2221, %v2179
      %v2223 = vpop.permute.xlu0 %2222
      %2224 = vset.pattern.permute.xlu0 0
      %2225 = vperm.xlu0 %2224, %v2180
      %v2226 = vpop.permute.xlu0 %2225
      %2227 = vset.pattern.permute.xlu0 0
      %2228 = vperm.xlu0 %2227, %v2181
      %v2229 = vpop.permute.xlu0 %2228
      %vm2230 = vcmp.eq.s32.totalorder %v2184, 1
      %vm2231 = vcmp.eq.s32.totalorder %v2187, 1
      %vm2232 = vcmp.eq.s32.totalorder %v2190, 1
      %vm2233 = vcmp.eq.s32.totalorder %v2193, 1
      %vm2234 = vcmp.eq.s32.totalorder %v2196, 1
      %vm2235 = vcmp.eq.s32.totalorder %v2199, 1
      %vm2236 = vcmp.eq.s32.totalorder %v2202, 1
      %vm2237 = vcmp.eq.s32.totalorder %v2205, 1
      %vm2238 = vcmp.eq.s32.totalorder %v2208, 1
      %vm2239 = vcmp.eq.s32.totalorder %v2211, 1
      %vm2240 = vcmp.eq.s32.totalorder %v2214, 1
      %vm2241 = vcmp.eq.s32.totalorder %v2217, 1
      %vm2242 = vcmp.eq.s32.totalorder %v2220, 1
      %vm2243 = vcmp.eq.s32.totalorder %v2223, 1
      %vm2244 = vcmp.eq.s32.totalorder %v2226, 1
      %vm2245 = vcmp.eq.s32.totalorder %v2229, 1
      %v2246 = vsel %vm2230, %v2150, %v2054
      %v2247 = vsel %vm2231, %v2151, %v2055
      %v2248 = vsel %vm2232, %v2152, %v2056
      %v2249 = vsel %vm2233, %v2153, %v2057
      %v2250 = vsel %vm2234, %v2154, %v2058
      %v2251 = vsel %vm2235, %v2155, %v2059
      %v2252 = vsel %vm2236, %v2156, %v2060
      %v2253 = vsel %vm2237, %v2157, %v2061
      %v2254 = vsel %vm2238, %v2158, %v2062
      %v2255 = vsel %vm2239, %v2159, %v2063
      %v2256 = vsel %vm2240, %v2160, %v2064
      %v2257 = vsel %vm2241, %v2161, %v2065
      %v2258 = vsel %vm2242, %v2162, %v2066
      %v2259 = vsel %vm2243, %v2163, %v2067
      %v2260 = vsel %vm2244, %v2164, %v2068
      %v2261 = vsel %vm2245, %v2165, %v2069
      %2262 = vst [vmem:[#allocation7] sm:$0xff] %v2246
      %2263 = vst [vmem:[#allocation7 + $0x8] sm:$0xff] %v2247
      %2264 = vst [vmem:[#allocation7 + $0x10] sm:$0xff] %v2248
      %2265 = vst [vmem:[#allocation7 + $0x18] sm:$0xff] %v2249
      %2266 = vst [vmem:[#allocation7 + $0x20] sm:$0xff] %v2250
      %2267 = vst [vmem:[#allocation7 + $0x28] sm:$0xff] %v2251
      %2268 = vst [vmem:[#allocation7 + $0x30] sm:$0xff] %v2252
      %2269 = vst [vmem:[#allocation7 + $0x38] sm:$0xff] %v2253
      %2270 = vst [vmem:[#allocation7 + $0x40] sm:$0xff] %v2254
      %2271 = vst [vmem:[#allocation7 + $0x48] sm:$0xff] %v2255
      %2272 = vst [vmem:[#allocation7 + $0x50] sm:$0xff] %v2256
      %2273 = vst [vmem:[#allocation7 + $0x58] sm:$0xff] %v2257
      %2274 = vst [vmem:[#allocation7 + $0x60] sm:$0xff] %v2258
      %2275 = vst [vmem:[#allocation7 + $0x68] sm:$0xff] %v2259
      %2276 = vst [vmem:[#allocation7 + $0x70] sm:$0xff] %v2260
      %2277 = vst [vmem:[#allocation7 + $0x78] sm:$0xff] %v2261
    $region41: #{tpu_custom_call.1} parent=1 // pred_fallthru
      _
    // Predicated region
    $region42: #{tpu_custom_call.1} parent=1 // pred_check
      _
    $region43: #{tpu_custom_call.1} parent=1 // pred_check_branch
      %2279 = sbr.rel (0) target = $region45
    $region44: #{tpu_custom_call.1} parent=1 // pred_region
      %s2281 = ssub.s32 2048, 2048
      %2282 = vsyncadd [#allocation8], %s2281
      %s2283 = sshll.u32 [#allocation7], 4
      %s2284 = int_to_ptr.vmem [resolvable:$true] %s2283
      %2289 = dma.vmem_to_hbm [thread:$0]  %s2284, 2048, %s9, [#allocation8], 128, 128, 8
    $region45: #{tpu_custom_call.1} parent=1 // pred_fallthru
      _
    // Predicated region
    $region46: #{tpu_custom_call.1} parent=1 // pred_check
      _
    $region47: #{tpu_custom_call.1} parent=1 // pred_check_branch
      %2291 = sbr.rel (0) target = $region49
    $region48: #{tpu_custom_call.1} parent=1 // pred_region
      %2292 = dma.done [#allocation8], 2048
    $region49: #{tpu_custom_call.1} parent=1 // pred_fallthru
      _
    %2293 = vsyncpa [#allocation8], 1

</llo_original>
